<compile_context>
chip_gen: v5e
topology: v5e:2x2
jax: 0.10.0
libtpu: 0.0.40
codegen_flags: <defaults>
</compile_context>

<pallas_src>
import numpy as np
import jax
import jax.numpy as jnp
from jax.experimental import pallas as pl
from jax.experimental.pallas import tpu as pltpu

HM = 40                       # HM_vector_size
ME = 10                       # ME_vector_size
TF = 5                        # TF_vector_size
NA = 10                       # num_attentions
SEG = [2 * HM, 2 * ME, TF]    # [80, 20, 5]
D = sum(SEG)                  # 105 = concatenated context width
DP = 128                      # lane-padded context width


def _round_up(n, m):
    return ((n + m - 1) // m) * m


def _default_b_blk(B):
    """Batch-block heuristic.

    - small/medium batches: round up to 8 (not to 128) -> no wasted compute.
    - large batches: 512-row blocks on v5e/v6e (128 MiB VMEM), 256 on v7x /
      unknown (64 MiB VMEM), and always >= 2 grid steps so the "parallel"
      batch axis can shard across v7x's two TensorCores while amortizing the
      ~0.35 us per-grid-step pipeline overhead.
    """
    rb = _round_up(max(B, 1), 8)
    if rb <= 16:
        return rb
    kind = ""
    try:
        kind = jax.devices()[0].device_kind.lower()
    except Exception:
        pass
    target = 512 if ("v5" in kind or "v6" in kind) else 256
    return max(16, min(target, _round_up((rb + 1) // 2, 8)))


# ----------------------------------------------------------------------------
# Pallas kernel: one grid step == one block of batch rows (sublane axis).
# ----------------------------------------------------------------------------
def _multi_attention_kernel(x_ref,        # (Bblk, DP)  f32   padded contexts
                            w_ref,        # (DP, 2*NA*DP) bf16 fused [A | gather] per head
                            ba_ref,       # (1, NA*DP)  f32   A bias (-1e30 on pad lanes)
                            wr_ref,       # (NA*DP, DP) bf16  fused dim-reduce weight
                            bo_ref,       # (1, DP)     f32   fused dim-reduce bias
                            out_ref,      # (Bblk, DP)  f32   output (padded)
                            alpha_ref):   # (Bblk, NA*DP) bf16 alpha (head-major, padded)
    xb = x_ref[...].astype(jnp.bfloat16)                      # bf16 LHS for all matmuls
    acc = jnp.zeros(out_ref.shape, jnp.float32)               # small f32 accumulator

    for a in range(NA):                                       # unrolled, 10 heads
        lo = a * DP
        # One 256-wide bf16 MXU matmul per head: [scores_a | expanded_a].
        se = jnp.dot(xb, w_ref[:, 2 * lo:2 * lo + 2 * DP],
                     preferred_element_type=jnp.float32)      # (Bblk, 2*DP) f32
        sa = se[:, :DP] + ba_ref[:, lo:lo + DP]               # f32 scores; pads -> -1e30
        ea = se[:, DP:]                                       # expanded_h, head-major slab

        # f32 softmax over the 128 lanes of this head; pad lanes underflow to 0.
        m = jnp.max(sa, axis=-1, keepdims=True)
        e = jnp.exp(sa - m)
        alpha_a = e * pl.reciprocal(jnp.sum(e, axis=-1, keepdims=True), approx=True)

        # Lane-dense, 128-aligned bf16 store of this head's attention weights.
        alpha_ref[:, lo:lo + DP] = alpha_a.astype(alpha_ref.dtype)

        # h_tilde for this head and per-head fused dim-reduce accumulation.
        h_a = (alpha_a * ea).astype(jnp.bfloat16)
        acc = acc + jnp.dot(h_a, wr_ref[lo:lo + DP, :],
                            preferred_element_type=jnp.float32)

    out_ref[...] = acc + bo_ref[...]


# ----------------------------------------------------------------------------
# Wrapper
# ----------------------------------------------------------------------------
def multi_attention_forward(context_vector_list, kp, b_blk=None,
                            alpha_dtype=jnp.bfloat16,
                            return_padded_alpha=False):
    """context_vector_list: [(B,80), (B,20), (B,5)] f32.
    Returns (output (B,105), alpha (B,1050)) matching the PyTorch module.
    With return_padded_alpha=True, alpha is returned as the kernel-native
    (B, NA, 128) head-major slab (pad lanes are 0) to avoid the extra
    HBM round-trip of the compacting slice."""
    x = jnp.concatenate(context_vector_list, axis=1).astype(jnp.float32)   # (B, D)
    B = x.shape[0]
    if b_blk is None:
        b_blk = _default_b_blk(B)
    Bp = _round_up(B, b_blk)
    x_p = jnp.zeros((Bp, DP), jnp.float32).at[:B, :D].set(x)

    full = lambda i: (0, 0)
    row = lambda i: (i, 0)

    alpha_itemsize = jnp.dtype(alpha_dtype).itemsize
    cost = pl.CostEstimate(
        flops=6 * Bp * NA * DP * DP,                 # 2 matmuls/head, bf16 -> f32
        transcendentals=Bp * NA * DP,                # exp
        bytes_accessed=(Bp * DP * 4 * 2              # x in + out
                        + Bp * NA * DP * alpha_itemsize
                        + (DP * 2 * NA * DP + NA * DP * DP) * 2   # bf16 weights
                        + (NA * DP + DP) * 4))                    # f32 biases
    # Raise scoped VMEM only for the big v5e/v6e blocks; v7x stays <=256 rows
    # well under its 64 MiB physical VMEM with the default scoped limit.
    vmem_limit = 64 * 1024 * 1024 if b_blk >= 512 else None

    out_p, alpha_p = pl.pallas_call(
        _multi_attention_kernel,
        grid=(Bp // b_blk,),
        in_specs=[
            pl.BlockSpec((b_blk, DP), row),            # contexts (batch block)
            pl.BlockSpec((DP, 2 * NA * DP), full),     # fused [A | gather] weight (bf16)
            pl.BlockSpec((1, NA * DP), full),          # A bias (f32, -1e30 pads)
            pl.BlockSpec((NA * DP, DP), full),         # fused dim-reduce weight (bf16)
            pl.BlockSpec((1, DP), full),               # fused dim-reduce bias (f32)
        ],
        out_specs=(
            pl.BlockSpec((b_blk, DP), row),            # output, lane-dense rows
            pl.BlockSpec((b_blk, NA * DP), row),       # alpha, lane-dense bf16 rows
        ),
        out_shape=(jax.ShapeDtypeStruct((Bp, DP), jnp.float32),
                   jax.ShapeDtypeStruct((Bp, NA * DP), alpha_dtype)),
        compiler_params=pltpu.CompilerParams(
            dimension_semantics=("parallel",),
            vmem_limit_bytes=vmem_limit),
        cost_estimate=cost,
    )(x_p, kp["w"], kp["ba"], kp["wr"], kp["bo"])

    output = out_p[:B, :D]
    if return_padded_alpha:
        # alpha[b, a, :D] == PyTorch alpha[b, a*105:(a+1)*105]; pad lanes are 0.
        return output, alpha_p[:B].reshape(B, NA, DP)
    alpha = (alpha_p[:B].reshape(B, NA, DP)[:, :, :D]
             .reshape(B, NA * D).astype(jnp.float32))
    return output, alpha


# ----------------------------------------------------------------------------
# PyTorch-style parameter init (nn.Linear default uniform +/-1/sqrt(fan_in))
# ----------------------------------------------------------------------------
def init_params(key):
    def lin(k, fan_out, fan_in):
        bound = 1.0 / np.sqrt(fan_in)
        kw, kb = jax.random.split(k)
        return (jax.random.uniform(kw, (fan_out, fan_in), jnp.float32, -bound, bound),
                jax.random.uniform(kb, (fan_out,), jnp.float32, -bound, bound))
    ks = jax.random.split(key, 4)
    A_w, A_b = lin(ks[0], NA * D, D)
    HM_w, HM_b = lin(ks[1], SEG[0], NA * SEG[0])
    ME_w, ME_b = lin(ks[2], SEG[1], NA * SEG[1])
    TF_w, TF_b = lin(ks[3], SEG[2], NA * SEG[2])
    return dict(A_w=A_w, A_b=A_b, HM_w=HM_w, HM_b=HM_b,
                ME_w=ME_w, ME_b=ME_b, TF_w=TF_w, TF_b=TF_b)


# ----------------------------------------------------------------------------
# Host-side (one-time) repacking of PyTorch-layout weights into TPU-friendly
# lane-padded, head-major bf16 constants.
# ----------------------------------------------------------------------------
def pack_params(p):
    Aw = np.asarray(p["A_w"], np.float32)          # (NA*D, D)
    Ab = np.asarray(p["A_b"], np.float32)          # (NA*D,)
    HMw = np.asarray(p["HM_w"], np.float32)        # (80, 800)
    MEw = np.asarray(p["ME_w"], np.float32)        # (20, 200)
    TFw = np.asarray(p["TF_w"], np.float32)        # (5, 50)

    wa = np.zeros((DP, NA * DP), np.float32)
    ba = np.full((1, NA * DP), -1e30, np.float32)  # pads -> exactly 0 after softmax
    for a in range(NA):
        wa[:D, a * DP:a * DP + D] = Aw[a * D:(a + 1) * D, :].T
        ba[0, a * DP:a * DP + D] = Ab[a * D:(a + 1) * D]

    # P: constant 0/1 gather matrix producing expanded_h (head-major, padded)
    # from the concatenated context; Wr: dim-reduce weights rearranged to the
    # same head-major padded layout (this also reproduces the PyTorch code's
    # alpha-vs-expanded_h flat-layout mismatch exactly).
    P = np.zeros((DP, NA * DP), np.float32)
    Wr = np.zeros((NA * DP, DP), np.float32)
    hm_end, me_end = NA * SEG[0], NA * (SEG[0] + SEG[1])     # 800, 1000
    for a in range(NA):
        for d in range(D):
            k = a * D + d                      # flat index in PyTorch h_tilde
            row = a * DP + d                   # flat index in padded layout
            if k < hm_end:
                P[k % SEG[0], row] = 1.0
                Wr[row, 0:SEG[0]] = HMw[:, k]
            elif k < me_end:
                kk = k - hm_end
                P[SEG[0] + kk % SEG[1], row] = 1.0
                Wr[row, SEG[0]:SEG[0] + SEG[1]] = MEw[:, kk]
            else:
                kk = k - me_end
                P[SEG[0] + SEG[1] + kk % SEG[2], row] = 1.0
                Wr[row, SEG[0] + SEG[1]:D] = TFw[:, kk]

    # Fuse A-weight and gather matrix per head -> one 256-wide MXU op per head.
    Wbig = np.zeros((DP, 2 * NA * DP), np.float32)
    for a in range(NA):
        Wbig[:, 2 * a * DP:2 * a * DP + DP] = wa[:, a * DP:(a + 1) * DP]
        Wbig[:, 2 * a * DP + DP:2 * (a + 1) * DP] = P[:, a * DP:(a + 1) * DP]

    bo = np.zeros((1, DP), np.float32)
    bo[0, 0:SEG[0]] = np.asarray(p["HM_b"], np.float32)
    bo[0, SEG[0]:SEG[0] + SEG[1]] = np.asarray(p["ME_b"], np.float32)
    bo[0, SEG[0] + SEG[1]:D] = np.asarray(p["TF_b"], np.float32)

    # bf16 MXU operands (gather matrix is 0/1 -> exact in bf16); biases stay f32
    # so the -1e30 pad bias and softmax math remain in f32.
    return dict(w=jnp.asarray(Wbig, jnp.bfloat16),
                ba=jnp.asarray(ba),
                wr=jnp.asarray(Wr, jnp.bfloat16),
                bo=jnp.asarray(bo))


# ----------------------------------------------------------------------------
# Pure numpy reference (mirrors the PyTorch forward literally)
# ----------------------------------------------------------------------------
def ref_forward(context_vector_list, p):
    vecs = [np.asarray(v, np.float64) for v in context_vector_list]
    x = np.concatenate(vecs, axis=1)                              # (B, 105)
    B = x.shape[0]
    s = x @ np.asarray(p["A_w"], np.float64).T + np.asarray(p["A_b"], np.float64)
    s3 = s.reshape(B, NA, D)
    s3 = s3 - s3.max(axis=2, keepdims=True)
    e = np.exp(s3)
    alpha = (e / e.sum(axis=2, keepdims=True)).reshape(B, NA * D)
    expanded = np.concatenate([np.tile(v, (1, NA)) for v in vecs], axis=1)
    h = alpha * expanded
    outs, start = [], 0
    for (wn, bn), sz in zip([("HM_w", "HM_b"), ("ME_w", "ME_b"), ("TF_w", "TF_b")], SEG):
        seg = sz * NA
        outs.append(h[:, start:start + seg] @ np.asarray(p[wn], np.float64).T
                    + np.asarray(p[bn], np.float64))
        start += seg
    return np.concatenate(outs, axis=1), alpha


# ----------------------------------------------------------------------------
if __name__ == "__main__":
    key = jax.random.PRNGKey(0)
    pkey, k1, k2, k3 = jax.random.split(key, 4)

    B = 2
    params = init_params(pkey)
    hm_ctx = jax.random.normal(k1, (B, 2 * HM), jnp.float32)      # (2, 80)
    me_ctx = jax.random.normal(k2, (B, 2 * ME), jnp.float32)      # (2, 20)
    tf_ctx = jax.random.normal(k3, (B, TF), jnp.float32)          # (2, 5)

    kp = pack_params(params)
    out, alpha = multi_attention_forward([hm_ctx, me_ctx, tf_ctx], kp)
    out = jax.block_until_ready(out)
    alpha = jax.block_until_ready(alpha)

    assert out.shape == (B, D) and alpha.shape == (B, NA * D)

    out_ref, alpha_ref = ref_forward([hm_ctx, me_ctx, tf_ctx], params)
    # bf16 MXU operands + bf16 alpha writeback -> slightly wider tolerances.
    assert np.allclose(np.asarray(out), out_ref, atol=3e-3, rtol=3e-2)
    assert np.allclose(np.asarray(alpha), alpha_ref, atol=3e-3, rtol=3e-2)
    # per-head softmax sanity: each head's 105 weights sum to ~1 (bf16 storage)
    assert np.allclose(np.asarray(alpha).reshape(B, NA, D).sum(-1), 1.0, atol=1e-2)

    print("KERNEL_OK")
</pallas_src>

<mosaic_0001>
module attributes {stable_mosaic.version = 11 : i64} {
  func.func @_multi_attention_kernel(%arg0: i32, %arg1: memref<8x128xf32, #tpu.memory_space<vmem>>, %arg2: memref<128x2560xbf16, #tpu.memory_space<vmem>>, %arg3: memref<1x1280xf32, #tpu.memory_space<vmem>>, %arg4: memref<1280x128xbf16, #tpu.memory_space<vmem>>, %arg5: memref<1x128xf32, #tpu.memory_space<vmem>>, %arg6: memref<8x128xf32, #tpu.memory_space<vmem>>, %arg7: memref<8x1280xbf16, #tpu.memory_space<vmem>>) attributes {dimension_semantics = [#tpu.dimension_semantics<parallel>], iteration_bounds = array<i64: 1>, scalar_prefetch = 0 : i64, scratch_operands = 0 : i64, tpu.core_type = #tpu.core_type<tc>, window_params = [{transform_indices = @transform_0, window_bounds = array<i64: 8, 128>}, {pipeline_mode = #tpu.pipeline_mode<synchronous>, transform_indices = @transform_1, window_bounds = array<i64: 128, 2560>}, {pipeline_mode = #tpu.pipeline_mode<synchronous>, transform_indices = @transform_2, window_bounds = array<i64: 1, 1280>}, {pipeline_mode = #tpu.pipeline_mode<synchronous>, transform_indices = @transform_3, window_bounds = array<i64: 1280, 128>}, {pipeline_mode = #tpu.pipeline_mode<synchronous>, transform_indices = @transform_4, window_bounds = array<i64: 1, 128>}, {transform_indices = @transform_5, window_bounds = array<i64: 8, 128>}, {transform_indices = @transform_6, window_bounds = array<i64: 8, 1280>}]} {
    %c0 = arith.constant 0 : index
    %c0_0 = arith.constant 0 : index
    %0 = vector.load %arg1[%c0, %c0_0] : memref<8x128xf32, #tpu.memory_space<vmem>>, vector<8x128xf32>
    %1 = arith.truncf %0 : vector<8x128xf32> to vector<8x128xbf16>
    %cst = arith.constant 0.000000e+00 : f32
    %2 = vector.broadcast %cst : f32 to vector<8x128xf32>
    %c0_1 = arith.constant 0 : index
    %c0_2 = arith.constant 0 : index
    %3 = vector.load %arg2[%c0_1, %c0_2] : memref<128x2560xbf16, #tpu.memory_space<vmem>>, vector<128x256xbf16>
    %cst_3 = arith.constant dense<0.000000e+00> : vector<8x256xf32>
    %4 = tpu.matmul %1, %3, %cst_3 {dimension_numbers = #tpu.dot_dimension_numbers<[1], [0], [0], [1], [0, 0, 1, 1], [], []>} : vector<8x128xbf16>, vector<128x256xbf16>, vector<8x256xf32> -> vector<8x256xf32>
    %5 = vector.extract_strided_slice %4 {offsets = [0, 0], sizes = [8, 128], strides = [1, 1]} : vector<8x256xf32> to vector<8x128xf32>
    %c0_4 = arith.constant 0 : index
    %c0_5 = arith.constant 0 : index
    %6 = vector.load %arg3[%c0_4, %c0_5] : memref<1x1280xf32, #tpu.memory_space<vmem>>, vector<1x128xf32>
    %7 = vector.broadcast %6 : vector<1x128xf32> to vector<8x128xf32>
    %8 = arith.addf %5, %7 : vector<8x128xf32>
    %9 = vector.extract_strided_slice %4 {offsets = [0, 128], sizes = [8, 128], strides = [1, 1]} : vector<8x256xf32> to vector<8x128xf32>
    %cst_6 = arith.constant dense<0xFF800000> : vector<8xf32>
    %10 = vector.multi_reduction <maximumf>, %8, %cst_6 [1] : vector<8x128xf32> to vector<8xf32>
    %11 = vector.shape_cast %10 : vector<8xf32> to vector<8x1xf32>
    %12 = vector.broadcast %11 : vector<8x1xf32> to vector<8x128xf32>
    %13 = arith.subf %8, %12 : vector<8x128xf32>
    %14 = math.exp %13 : vector<8x128xf32>
    %cst_7 = arith.constant dense<0.000000e+00> : vector<8xf32>
    %15 = vector.multi_reduction <add>, %14, %cst_7 [1] : vector<8x128xf32> to vector<8xf32>
    %16 = vector.shape_cast %15 : vector<8xf32> to vector<8x1xf32>
    %17 = tpu.reciprocal %16 {approx = true} : vector<8x1xf32> -> vector<8x1xf32>
    %18 = vector.broadcast %17 : vector<8x1xf32> to vector<8x128xf32>
    %19 = arith.mulf %14, %18 : vector<8x128xf32>
    %20 = arith.truncf %19 : vector<8x128xf32> to vector<8x128xbf16>
    %c0_8 = arith.constant 0 : index
    %c0_9 = arith.constant 0 : index
    %21 = vector.load %arg7[%c0_8, %c0_9] : memref<8x1280xbf16, #tpu.memory_space<vmem>>, vector<8x128xbf16>
    tpu.vector_store %arg7[%c0_8, %c0_9], %20 {strides = array<i32>} : memref<8x1280xbf16, #tpu.memory_space<vmem>>, vector<8x128xbf16>,
    %22 = arith.mulf %19, %9 : vector<8x128xf32>
    %23 = arith.truncf %22 : vector<8x128xf32> to vector<8x128xbf16>
    %c0_10 = arith.constant 0 : index
    %c0_11 = arith.constant 0 : index
    %24 = vector.load %arg4[%c0_10, %c0_11] : memref<1280x128xbf16, #tpu.memory_space<vmem>>, vector<128x128xbf16>
    %cst_12 = arith.constant dense<0.000000e+00> : vector<8x128xf32>
    %25 = tpu.matmul %23, %24, %cst_12 {dimension_numbers = #tpu.dot_dimension_numbers<[1], [0], [0], [1], [0, 0, 1, 1], [], []>} : vector<8x128xbf16>, vector<128x128xbf16>, vector<8x128xf32> -> vector<8x128xf32>
    %26 = arith.addf %2, %25 : vector<8x128xf32>
    %c0_13 = arith.constant 0 : index
    %c256 = arith.constant 256 : index
    %27 = vector.load %arg2[%c0_13, %c256] : memref<128x2560xbf16, #tpu.memory_space<vmem>>, vector<128x256xbf16>
    %cst_14 = arith.constant dense<0.000000e+00> : vector<8x256xf32>
    %28 = tpu.matmul %1, %27, %cst_14 {dimension_numbers = #tpu.dot_dimension_numbers<[1], [0], [0], [1], [0, 0, 1, 1], [], []>} : vector<8x128xbf16>, vector<128x256xbf16>, vector<8x256xf32> -> vector<8x256xf32>
    %29 = vector.extract_strided_slice %28 {offsets = [0, 0], sizes = [8, 128], strides = [1, 1]} : vector<8x256xf32> to vector<8x128xf32>
    %c0_15 = arith.constant 0 : index
    %c128 = arith.constant 128 : index
    %30 = vector.load %arg3[%c0_15, %c128] : memref<1x1280xf32, #tpu.memory_space<vmem>>, vector<1x128xf32>
    %31 = vector.broadcast %30 : vector<1x128xf32> to vector<8x128xf32>
    %32 = arith.addf %29, %31 : vector<8x128xf32>
    %33 = vector.extract_strided_slice %28 {offsets = [0, 128], sizes = [8, 128], strides = [1, 1]} : vector<8x256xf32> to vector<8x128xf32>
    %cst_16 = arith.constant dense<0xFF800000> : vector<8xf32>
    %34 = vector.multi_reduction <maximumf>, %32, %cst_16 [1] : vector<8x128xf32> to vector<8xf32>
    %35 = vector.shape_cast %34 : vector<8xf32> to vector<8x1xf32>
    %36 = vector.broadcast %35 : vector<8x1xf32> to vector<8x128xf32>
    %37 = arith.subf %32, %36 : vector<8x128xf32>
    %38 = math.exp %37 : vector<8x128xf32>
    %cst_17 = arith.constant dense<0.000000e+00> : vector<8xf32>
    %39 = vector.multi_reduction <add>, %38, %cst_17 [1] : vector<8x128xf32> to vector<8xf32>
    %40 = vector.shape_cast %39 : vector<8xf32> to vector<8x1xf32>
    %41 = tpu.reciprocal %40 {approx = true} : vector<8x1xf32> -> vector<8x1xf32>
    %42 = vector.broadcast %41 : vector<8x1xf32> to vector<8x128xf32>
    %43 = arith.mulf %38, %42 : vector<8x128xf32>
    %44 = arith.truncf %43 : vector<8x128xf32> to vector<8x128xbf16>
    %c0_18 = arith.constant 0 : index
    %c128_19 = arith.constant 128 : index
    %45 = vector.load %arg7[%c0_18, %c128_19] : memref<8x1280xbf16, #tpu.memory_space<vmem>>, vector<8x128xbf16>
    tpu.vector_store %arg7[%c0_18, %c128_19], %44 {strides = array<i32>} : memref<8x1280xbf16, #tpu.memory_space<vmem>>, vector<8x128xbf16>,
    %46 = arith.mulf %43, %33 : vector<8x128xf32>
    %47 = arith.truncf %46 : vector<8x128xf32> to vector<8x128xbf16>
    %c128_20 = arith.constant 128 : index
    %c0_21 = arith.constant 0 : index
    %48 = vector.load %arg4[%c128_20, %c0_21] : memref<1280x128xbf16, #tpu.memory_space<vmem>>, vector<128x128xbf16>
    %cst_22 = arith.constant dense<0.000000e+00> : vector<8x128xf32>
    %49 = tpu.matmul %47, %48, %cst_22 {dimension_numbers = #tpu.dot_dimension_numbers<[1], [0], [0], [1], [0, 0, 1, 1], [], []>} : vector<8x128xbf16>, vector<128x128xbf16>, vector<8x128xf32> -> vector<8x128xf32>
    %50 = arith.addf %26, %49 : vector<8x128xf32>
    %c0_23 = arith.constant 0 : index
    %c512 = arith.constant 512 : index
    %51 = vector.load %arg2[%c0_23, %c512] : memref<128x2560xbf16, #tpu.memory_space<vmem>>, vector<128x256xbf16>
    %cst_24 = arith.constant dense<0.000000e+00> : vector<8x256xf32>
    %52 = tpu.matmul %1, %51, %cst_24 {dimension_numbers = #tpu.dot_dimension_numbers<[1], [0], [0], [1], [0, 0, 1, 1], [], []>} : vector<8x128xbf16>, vector<128x256xbf16>, vector<8x256xf32> -> vector<8x256xf32>
    %53 = vector.extract_strided_slice %52 {offsets = [0, 0], sizes = [8, 128], strides = [1, 1]} : vector<8x256xf32> to vector<8x128xf32>
    %c0_25 = arith.constant 0 : index
    %c256_26 = arith.constant 256 : index
    %54 = vector.load %arg3[%c0_25, %c256_26] : memref<1x1280xf32, #tpu.memory_space<vmem>>, vector<1x128xf32>
    %55 = vector.broadcast %54 : vector<1x128xf32> to vector<8x128xf32>
    %56 = arith.addf %53, %55 : vector<8x128xf32>
    %57 = vector.extract_strided_slice %52 {offsets = [0, 128], sizes = [8, 128], strides = [1, 1]} : vector<8x256xf32> to vector<8x128xf32>
    %cst_27 = arith.constant dense<0xFF800000> : vector<8xf32>
    %58 = vector.multi_reduction <maximumf>, %56, %cst_27 [1] : vector<8x128xf32> to vector<8xf32>
    %59 = vector.shape_cast %58 : vector<8xf32> to vector<8x1xf32>
    %60 = vector.broadcast %59 : vector<8x1xf32> to vector<8x128xf32>
    %61 = arith.subf %56, %60 : vector<8x128xf32>
    %62 = math.exp %61 : vector<8x128xf32>
    %cst_28 = arith.constant dense<0.000000e+00> : vector<8xf32>
    %63 = vector.multi_reduction <add>, %62, %cst_28 [1] : vector<8x128xf32> to vector<8xf32>
    %64 = vector.shape_cast %63 : vector<8xf32> to vector<8x1xf32>
    %65 = tpu.reciprocal %64 {approx = true} : vector<8x1xf32> -> vector<8x1xf32>
    %66 = vector.broadcast %65 : vector<8x1xf32> to vector<8x128xf32>
    %67 = arith.mulf %62, %66 : vector<8x128xf32>
    %68 = arith.truncf %67 : vector<8x128xf32> to vector<8x128xbf16>
    %c0_29 = arith.constant 0 : index
    %c256_30 = arith.constant 256 : index
    %69 = vector.load %arg7[%c0_29, %c256_30] : memref<8x1280xbf16, #tpu.memory_space<vmem>>, vector<8x128xbf16>
    tpu.vector_store %arg7[%c0_29, %c256_30], %68 {strides = array<i32>} : memref<8x1280xbf16, #tpu.memory_space<vmem>>, vector<8x128xbf16>,
    %70 = arith.mulf %67, %57 : vector<8x128xf32>
    %71 = arith.truncf %70 : vector<8x128xf32> to vector<8x128xbf16>
    %c256_31 = arith.constant 256 : index
    %c0_32 = arith.constant 0 : index
    %72 = vector.load %arg4[%c256_31, %c0_32] : memref<1280x128xbf16, #tpu.memory_space<vmem>>, vector<128x128xbf16>
    %cst_33 = arith.constant dense<0.000000e+00> : vector<8x128xf32>
    %73 = tpu.matmul %71, %72, %cst_33 {dimension_numbers = #tpu.dot_dimension_numbers<[1], [0], [0], [1], [0, 0, 1, 1], [], []>} : vector<8x128xbf16>, vector<128x128xbf16>, vector<8x128xf32> -> vector<8x128xf32>
    %74 = arith.addf %50, %73 : vector<8x128xf32>
    %c0_34 = arith.constant 0 : index
    %c768 = arith.constant 768 : index
    %75 = vector.load %arg2[%c0_34, %c768] : memref<128x2560xbf16, #tpu.memory_space<vmem>>, vector<128x256xbf16>
    %cst_35 = arith.constant dense<0.000000e+00> : vector<8x256xf32>
    %76 = tpu.matmul %1, %75, %cst_35 {dimension_numbers = #tpu.dot_dimension_numbers<[1], [0], [0], [1], [0, 0, 1, 1], [], []>} : vector<8x128xbf16>, vector<128x256xbf16>, vector<8x256xf32> -> vector<8x256xf32>
    %77 = vector.extract_strided_slice %76 {offsets = [0, 0], sizes = [8, 128], strides = [1, 1]} : vector<8x256xf32> to vector<8x128xf32>
    %c0_36 = arith.constant 0 : index
    %c384 = arith.constant 384 : index
    %78 = vector.load %arg3[%c0_36, %c384] : memref<1x1280xf32, #tpu.memory_space<vmem>>, vector<1x128xf32>
    %79 = vector.broadcast %78 : vector<1x128xf32> to vector<8x128xf32>
    %80 = arith.addf %77, %79 : vector<8x128xf32>
    %81 = vector.extract_strided_slice %76 {offsets = [0, 128], sizes = [8, 128], strides = [1, 1]} : vector<8x256xf32> to vector<8x128xf32>
    %cst_37 = arith.constant dense<0xFF800000> : vector<8xf32>
    %82 = vector.multi_reduction <maximumf>, %80, %cst_37 [1] : vector<8x128xf32> to vector<8xf32>
    %83 = vector.shape_cast %82 : vector<8xf32> to vector<8x1xf32>
    %84 = vector.broadcast %83 : vector<8x1xf32> to vector<8x128xf32>
    %85 = arith.subf %80, %84 : vector<8x128xf32>
    %86 = math.exp %85 : vector<8x128xf32>
    %cst_38 = arith.constant dense<0.000000e+00> : vector<8xf32>
    %87 = vector.multi_reduction <add>, %86, %cst_38 [1] : vector<8x128xf32> to vector<8xf32>
    %88 = vector.shape_cast %87 : vector<8xf32> to vector<8x1xf32>
    %89 = tpu.reciprocal %88 {approx = true} : vector<8x1xf32> -> vector<8x1xf32>
    %90 = vector.broadcast %89 : vector<8x1xf32> to vector<8x128xf32>
    %91 = arith.mulf %86, %90 : vector<8x128xf32>
    %92 = arith.truncf %91 : vector<8x128xf32> to vector<8x128xbf16>
    %c0_39 = arith.constant 0 : index
    %c384_40 = arith.constant 384 : index
    %93 = vector.load %arg7[%c0_39, %c384_40] : memref<8x1280xbf16, #tpu.memory_space<vmem>>, vector<8x128xbf16>
    tpu.vector_store %arg7[%c0_39, %c384_40], %92 {strides = array<i32>} : memref<8x1280xbf16, #tpu.memory_space<vmem>>, vector<8x128xbf16>,
    %94 = arith.mulf %91, %81 : vector<8x128xf32>
    %95 = arith.truncf %94 : vector<8x128xf32> to vector<8x128xbf16>
    %c384_41 = arith.constant 384 : index
    %c0_42 = arith.constant 0 : index
    %96 = vector.load %arg4[%c384_41, %c0_42] : memref<1280x128xbf16, #tpu.memory_space<vmem>>, vector<128x128xbf16>
    %cst_43 = arith.constant dense<0.000000e+00> : vector<8x128xf32>
    %97 = tpu.matmul %95, %96, %cst_43 {dimension_numbers = #tpu.dot_dimension_numbers<[1], [0], [0], [1], [0, 0, 1, 1], [], []>} : vector<8x128xbf16>, vector<128x128xbf16>, vector<8x128xf32> -> vector<8x128xf32>
    %98 = arith.addf %74, %97 : vector<8x128xf32>
    %c0_44 = arith.constant 0 : index
    %c1024 = arith.constant 1024 : index
    %99 = vector.load %arg2[%c0_44, %c1024] : memref<128x2560xbf16, #tpu.memory_space<vmem>>, vector<128x256xbf16>
    %cst_45 = arith.constant dense<0.000000e+00> : vector<8x256xf32>
    %100 = tpu.matmul %1, %99, %cst_45 {dimension_numbers = #tpu.dot_dimension_numbers<[1], [0], [0], [1], [0, 0, 1, 1], [], []>} : vector<8x128xbf16>, vector<128x256xbf16>, vector<8x256xf32> -> vector<8x256xf32>
    %101 = vector.extract_strided_slice %100 {offsets = [0, 0], sizes = [8, 128], strides = [1, 1]} : vector<8x256xf32> to vector<8x128xf32>
    %c0_46 = arith.constant 0 : index
    %c512_47 = arith.constant 512 : index
    %102 = vector.load %arg3[%c0_46, %c512_47] : memref<1x1280xf32, #tpu.memory_space<vmem>>, vector<1x128xf32>
    %103 = vector.broadcast %102 : vector<1x128xf32> to vector<8x128xf32>
    %104 = arith.addf %101, %103 : vector<8x128xf32>
    %105 = vector.extract_strided_slice %100 {offsets = [0, 128], sizes = [8, 128], strides = [1, 1]} : vector<8x256xf32> to vector<8x128xf32>
    %cst_48 = arith.constant dense<0xFF800000> : vector<8xf32>
    %106 = vector.multi_reduction <maximumf>, %104, %cst_48 [1] : vector<8x128xf32> to vector<8xf32>
    %107 = vector.shape_cast %106 : vector<8xf32> to vector<8x1xf32>
    %108 = vector.broadcast %107 : vector<8x1xf32> to vector<8x128xf32>
    %109 = arith.subf %104, %108 : vector<8x128xf32>
    %110 = math.exp %109 : vector<8x128xf32>
    %cst_49 = arith.constant dense<0.000000e+00> : vector<8xf32>
    %111 = vector.multi_reduction <add>, %110, %cst_49 [1] : vector<8x128xf32> to vector<8xf32>
    %112 = vector.shape_cast %111 : vector<8xf32> to vector<8x1xf32>
    %113 = tpu.reciprocal %112 {approx = true} : vector<8x1xf32> -> vector<8x1xf32>
    %114 = vector.broadcast %113 : vector<8x1xf32> to vector<8x128xf32>
    %115 = arith.mulf %110, %114 : vector<8x128xf32>
    %116 = arith.truncf %115 : vector<8x128xf32> to vector<8x128xbf16>
    %c0_50 = arith.constant 0 : index
    %c512_51 = arith.constant 512 : index
    %117 = vector.load %arg7[%c0_50, %c512_51] : memref<8x1280xbf16, #tpu.memory_space<vmem>>, vector<8x128xbf16>
    tpu.vector_store %arg7[%c0_50, %c512_51], %116 {strides = array<i32>} : memref<8x1280xbf16, #tpu.memory_space<vmem>>, vector<8x128xbf16>,
    %118 = arith.mulf %115, %105 : vector<8x128xf32>
    %119 = arith.truncf %118 : vector<8x128xf32> to vector<8x128xbf16>
    %c512_52 = arith.constant 512 : index
    %c0_53 = arith.constant 0 : index
    %120 = vector.load %arg4[%c512_52, %c0_53] : memref<1280x128xbf16, #tpu.memory_space<vmem>>, vector<128x128xbf16>
    %cst_54 = arith.constant dense<0.000000e+00> : vector<8x128xf32>
    %121 = tpu.matmul %119, %120, %cst_54 {dimension_numbers = #tpu.dot_dimension_numbers<[1], [0], [0], [1], [0, 0, 1, 1], [], []>} : vector<8x128xbf16>, vector<128x128xbf16>, vector<8x128xf32> -> vector<8x128xf32>
    %122 = arith.addf %98, %121 : vector<8x128xf32>
    %c0_55 = arith.constant 0 : index
    %c1280 = arith.constant 1280 : index
    %123 = vector.load %arg2[%c0_55, %c1280] : memref<128x2560xbf16, #tpu.memory_space<vmem>>, vector<128x256xbf16>
    %cst_56 = arith.constant dense<0.000000e+00> : vector<8x256xf32>
    %124 = tpu.matmul %1, %123, %cst_56 {dimension_numbers = #tpu.dot_dimension_numbers<[1], [0], [0], [1], [0, 0, 1, 1], [], []>} : vector<8x128xbf16>, vector<128x256xbf16>, vector<8x256xf32> -> vector<8x256xf32>
    %125 = vector.extract_strided_slice %124 {offsets = [0, 0], sizes = [8, 128], strides = [1, 1]} : vector<8x256xf32> to vector<8x128xf32>
    %c0_57 = arith.constant 0 : index
    %c640 = arith.constant 640 : index
    %126 = vector.load %arg3[%c0_57, %c640] : memref<1x1280xf32, #tpu.memory_space<vmem>>, vector<1x128xf32>
    %127 = vector.broadcast %126 : vector<1x128xf32> to vector<8x128xf32>
    %128 = arith.addf %125, %127 : vector<8x128xf32>
    %129 = vector.extract_strided_slice %124 {offsets = [0, 128], sizes = [8, 128], strides = [1, 1]} : vector<8x256xf32> to vector<8x128xf32>
    %cst_58 = arith.constant dense<0xFF800000> : vector<8xf32>
    %130 = vector.multi_reduction <maximumf>, %128, %cst_58 [1] : vector<8x128xf32> to vector<8xf32>
    %131 = vector.shape_cast %130 : vector<8xf32> to vector<8x1xf32>
    %132 = vector.broadcast %131 : vector<8x1xf32> to vector<8x128xf32>
    %133 = arith.subf %128, %132 : vector<8x128xf32>
    %134 = math.exp %133 : vector<8x128xf32>
    %cst_59 = arith.constant dense<0.000000e+00> : vector<8xf32>
    %135 = vector.multi_reduction <add>, %134, %cst_59 [1] : vector<8x128xf32> to vector<8xf32>
    %136 = vector.shape_cast %135 : vector<8xf32> to vector<8x1xf32>
    %137 = tpu.reciprocal %136 {approx = true} : vector<8x1xf32> -> vector<8x1xf32>
    %138 = vector.broadcast %137 : vector<8x1xf32> to vector<8x128xf32>
    %139 = arith.mulf %134, %138 : vector<8x128xf32>
    %140 = arith.truncf %139 : vector<8x128xf32> to vector<8x128xbf16>
    %c0_60 = arith.constant 0 : index
    %c640_61 = arith.constant 640 : index
    %141 = vector.load %arg7[%c0_60, %c640_61] : memref<8x1280xbf16, #tpu.memory_space<vmem>>, vector<8x128xbf16>
    tpu.vector_store %arg7[%c0_60, %c640_61], %140 {strides = array<i32>} : memref<8x1280xbf16, #tpu.memory_space<vmem>>, vector<8x128xbf16>,
    %142 = arith.mulf %139, %129 : vector<8x128xf32>
    %143 = arith.truncf %142 : vector<8x128xf32> to vector<8x128xbf16>
    %c640_62 = arith.constant 640 : index
    %c0_63 = arith.constant 0 : index
    %144 = vector.load %arg4[%c640_62, %c0_63] : memref<1280x128xbf16, #tpu.memory_space<vmem>>, vector<128x128xbf16>
    %cst_64 = arith.constant dense<0.000000e+00> : vector<8x128xf32>
    %145 = tpu.matmul %143, %144, %cst_64 {dimension_numbers = #tpu.dot_dimension_numbers<[1], [0], [0], [1], [0, 0, 1, 1], [], []>} : vector<8x128xbf16>, vector<128x128xbf16>, vector<8x128xf32> -> vector<8x128xf32>
    %146 = arith.addf %122, %145 : vector<8x128xf32>
    %c0_65 = arith.constant 0 : index
    %c1536 = arith.constant 1536 : index
    %147 = vector.load %arg2[%c0_65, %c1536] : memref<128x2560xbf16, #tpu.memory_space<vmem>>, vector<128x256xbf16>
    %cst_66 = arith.constant dense<0.000000e+00> : vector<8x256xf32>
    %148 = tpu.matmul %1, %147, %cst_66 {dimension_numbers = #tpu.dot_dimension_numbers<[1], [0], [0], [1], [0, 0, 1, 1], [], []>} : vector<8x128xbf16>, vector<128x256xbf16>, vector<8x256xf32> -> vector<8x256xf32>
    %149 = vector.extract_strided_slice %148 {offsets = [0, 0], sizes = [8, 128], strides = [1, 1]} : vector<8x256xf32> to vector<8x128xf32>
    %c0_67 = arith.constant 0 : index
    %c768_68 = arith.constant 768 : index
    %150 = vector.load %arg3[%c0_67, %c768_68] : memref<1x1280xf32, #tpu.memory_space<vmem>>, vector<1x128xf32>
    %151 = vector.broadcast %150 : vector<1x128xf32> to vector<8x128xf32>
    %152 = arith.addf %149, %151 : vector<8x128xf32>
    %153 = vector.extract_strided_slice %148 {offsets = [0, 128], sizes = [8, 128], strides = [1, 1]} : vector<8x256xf32> to vector<8x128xf32>
    %cst_69 = arith.constant dense<0xFF800000> : vector<8xf32>
    %154 = vector.multi_reduction <maximumf>, %152, %cst_69 [1] : vector<8x128xf32> to vector<8xf32>
    %155 = vector.shape_cast %154 : vector<8xf32> to vector<8x1xf32>
    %156 = vector.broadcast %155 : vector<8x1xf32> to vector<8x128xf32>
    %157 = arith.subf %152, %156 : vector<8x128xf32>
    %158 = math.exp %157 : vector<8x128xf32>
    %cst_70 = arith.constant dense<0.000000e+00> : vector<8xf32>
    %159 = vector.multi_reduction <add>, %158, %cst_70 [1] : vector<8x128xf32> to vector<8xf32>
    %160 = vector.shape_cast %159 : vector<8xf32> to vector<8x1xf32>
    %161 = tpu.reciprocal %160 {approx = true} : vector<8x1xf32> -> vector<8x1xf32>
    %162 = vector.broadcast %161 : vector<8x1xf32> to vector<8x128xf32>
    %163 = arith.mulf %158, %162 : vector<8x128xf32>
    %164 = arith.truncf %163 : vector<8x128xf32> to vector<8x128xbf16>
    %c0_71 = arith.constant 0 : index
    %c768_72 = arith.constant 768 : index
    %165 = vector.load %arg7[%c0_71, %c768_72] : memref<8x1280xbf16, #tpu.memory_space<vmem>>, vector<8x128xbf16>
    tpu.vector_store %arg7[%c0_71, %c768_72], %164 {strides = array<i32>} : memref<8x1280xbf16, #tpu.memory_space<vmem>>, vector<8x128xbf16>,
    %166 = arith.mulf %163, %153 : vector<8x128xf32>
    %167 = arith.truncf %166 : vector<8x128xf32> to vector<8x128xbf16>
    %c768_73 = arith.constant 768 : index
    %c0_74 = arith.constant 0 : index
    %168 = vector.load %arg4[%c768_73, %c0_74] : memref<1280x128xbf16, #tpu.memory_space<vmem>>, vector<128x128xbf16>
    %cst_75 = arith.constant dense<0.000000e+00> : vector<8x128xf32>
    %169 = tpu.matmul %167, %168, %cst_75 {dimension_numbers = #tpu.dot_dimension_numbers<[1], [0], [0], [1], [0, 0, 1, 1], [], []>} : vector<8x128xbf16>, vector<128x128xbf16>, vector<8x128xf32> -> vector<8x128xf32>
    %170 = arith.addf %146, %169 : vector<8x128xf32>
    %c0_76 = arith.constant 0 : index
    %c1792 = arith.constant 1792 : index
    %171 = vector.load %arg2[%c0_76, %c1792] : memref<128x2560xbf16, #tpu.memory_space<vmem>>, vector<128x256xbf16>
    %cst_77 = arith.constant dense<0.000000e+00> : vector<8x256xf32>
    %172 = tpu.matmul %1, %171, %cst_77 {dimension_numbers = #tpu.dot_dimension_numbers<[1], [0], [0], [1], [0, 0, 1, 1], [], []>} : vector<8x128xbf16>, vector<128x256xbf16>, vector<8x256xf32> -> vector<8x256xf32>
    %173 = vector.extract_strided_slice %172 {offsets = [0, 0], sizes = [8, 128], strides = [1, 1]} : vector<8x256xf32> to vector<8x128xf32>
    %c0_78 = arith.constant 0 : index
    %c896 = arith.constant 896 : index
    %174 = vector.load %arg3[%c0_78, %c896] : memref<1x1280xf32, #tpu.memory_space<vmem>>, vector<1x128xf32>
    %175 = vector.broadcast %174 : vector<1x128xf32> to vector<8x128xf32>
    %176 = arith.addf %173, %175 : vector<8x128xf32>
    %177 = vector.extract_strided_slice %172 {offsets = [0, 128], sizes = [8, 128], strides = [1, 1]} : vector<8x256xf32> to vector<8x128xf32>
    %cst_79 = arith.constant dense<0xFF800000> : vector<8xf32>
    %178 = vector.multi_reduction <maximumf>, %176, %cst_79 [1] : vector<8x128xf32> to vector<8xf32>
    %179 = vector.shape_cast %178 : vector<8xf32> to vector<8x1xf32>
    %180 = vector.broadcast %179 : vector<8x1xf32> to vector<8x128xf32>
    %181 = arith.subf %176, %180 : vector<8x128xf32>
    %182 = math.exp %181 : vector<8x128xf32>
    %cst_80 = arith.constant dense<0.000000e+00> : vector<8xf32>
    %183 = vector.multi_reduction <add>, %182, %cst_80 [1] : vector<8x128xf32> to vector<8xf32>
    %184 = vector.shape_cast %183 : vector<8xf32> to vector<8x1xf32>
    %185 = tpu.reciprocal %184 {approx = true} : vector<8x1xf32> -> vector<8x1xf32>
    %186 = vector.broadcast %185 : vector<8x1xf32> to vector<8x128xf32>
    %187 = arith.mulf %182, %186 : vector<8x128xf32>
    %188 = arith.truncf %187 : vector<8x128xf32> to vector<8x128xbf16>
    %c0_81 = arith.constant 0 : index
    %c896_82 = arith.constant 896 : index
    %189 = vector.load %arg7[%c0_81, %c896_82] : memref<8x1280xbf16, #tpu.memory_space<vmem>>, vector<8x128xbf16>
    tpu.vector_store %arg7[%c0_81, %c896_82], %188 {strides = array<i32>} : memref<8x1280xbf16, #tpu.memory_space<vmem>>, vector<8x128xbf16>,
    %190 = arith.mulf %187, %177 : vector<8x128xf32>
    %191 = arith.truncf %190 : vector<8x128xf32> to vector<8x128xbf16>
    %c896_83 = arith.constant 896 : index
    %c0_84 = arith.constant 0 : index
    %192 = vector.load %arg4[%c896_83, %c0_84] : memref<1280x128xbf16, #tpu.memory_space<vmem>>, vector<128x128xbf16>
    %cst_85 = arith.constant dense<0.000000e+00> : vector<8x128xf32>
    %193 = tpu.matmul %191, %192, %cst_85 {dimension_numbers = #tpu.dot_dimension_numbers<[1], [0], [0], [1], [0, 0, 1, 1], [], []>} : vector<8x128xbf16>, vector<128x128xbf16>, vector<8x128xf32> -> vector<8x128xf32>
    %194 = arith.addf %170, %193 : vector<8x128xf32>
    %c0_86 = arith.constant 0 : index
    %c2048 = arith.constant 2048 : index
    %195 = vector.load %arg2[%c0_86, %c2048] : memref<128x2560xbf16, #tpu.memory_space<vmem>>, vector<128x256xbf16>
    %cst_87 = arith.constant dense<0.000000e+00> : vector<8x256xf32>
    %196 = tpu.matmul %1, %195, %cst_87 {dimension_numbers = #tpu.dot_dimension_numbers<[1], [0], [0], [1], [0, 0, 1, 1], [], []>} : vector<8x128xbf16>, vector<128x256xbf16>, vector<8x256xf32> -> vector<8x256xf32>
    %197 = vector.extract_strided_slice %196 {offsets = [0, 0], sizes = [8, 128], strides = [1, 1]} : vector<8x256xf32> to vector<8x128xf32>
    %c0_88 = arith.constant 0 : index
    %c1024_89 = arith.constant 1024 : index
    %198 = vector.load %arg3[%c0_88, %c1024_89] : memref<1x1280xf32, #tpu.memory_space<vmem>>, vector<1x128xf32>
    %199 = vector.broadcast %198 : vector<1x128xf32> to vector<8x128xf32>
    %200 = arith.addf %197, %199 : vector<8x128xf32>
    %201 = vector.extract_strided_slice %196 {offsets = [0, 128], sizes = [8, 128], strides = [1, 1]} : vector<8x256xf32> to vector<8x128xf32>
    %cst_90 = arith.constant dense<0xFF800000> : vector<8xf32>
    %202 = vector.multi_reduction <maximumf>, %200, %cst_90 [1] : vector<8x128xf32> to vector<8xf32>
    %203 = vector.shape_cast %202 : vector<8xf32> to vector<8x1xf32>
    %204 = vector.broadcast %203 : vector<8x1xf32> to vector<8x128xf32>
    %205 = arith.subf %200, %204 : vector<8x128xf32>
    %206 = math.exp %205 : vector<8x128xf32>
    %cst_91 = arith.constant dense<0.000000e+00> : vector<8xf32>
    %207 = vector.multi_reduction <add>, %206, %cst_91 [1] : vector<8x128xf32> to vector<8xf32>
    %208 = vector.shape_cast %207 : vector<8xf32> to vector<8x1xf32>
    %209 = tpu.reciprocal %208 {approx = true} : vector<8x1xf32> -> vector<8x1xf32>
    %210 = vector.broadcast %209 : vector<8x1xf32> to vector<8x128xf32>
    %211 = arith.mulf %206, %210 : vector<8x128xf32>
    %212 = arith.truncf %211 : vector<8x128xf32> to vector<8x128xbf16>
    %c0_92 = arith.constant 0 : index
    %c1024_93 = arith.constant 1024 : index
    %213 = vector.load %arg7[%c0_92, %c1024_93] : memref<8x1280xbf16, #tpu.memory_space<vmem>>, vector<8x128xbf16>
    tpu.vector_store %arg7[%c0_92, %c1024_93], %212 {strides = array<i32>} : memref<8x1280xbf16, #tpu.memory_space<vmem>>, vector<8x128xbf16>,
    %214 = arith.mulf %211, %201 : vector<8x128xf32>
    %215 = arith.truncf %214 : vector<8x128xf32> to vector<8x128xbf16>
    %c1024_94 = arith.constant 1024 : index
    %c0_95 = arith.constant 0 : index
    %216 = vector.load %arg4[%c1024_94, %c0_95] : memref<1280x128xbf16, #tpu.memory_space<vmem>>, vector<128x128xbf16>
    %cst_96 = arith.constant dense<0.000000e+00> : vector<8x128xf32>
    %217 = tpu.matmul %215, %216, %cst_96 {dimension_numbers = #tpu.dot_dimension_numbers<[1], [0], [0], [1], [0, 0, 1, 1], [], []>} : vector<8x128xbf16>, vector<128x128xbf16>, vector<8x128xf32> -> vector<8x128xf32>
    %218 = arith.addf %194, %217 : vector<8x128xf32>
    %c0_97 = arith.constant 0 : index
    %c2304 = arith.constant 2304 : index
    %219 = vector.load %arg2[%c0_97, %c2304] : memref<128x2560xbf16, #tpu.memory_space<vmem>>, vector<128x256xbf16>
    %cst_98 = arith.constant dense<0.000000e+00> : vector<8x256xf32>
    %220 = tpu.matmul %1, %219, %cst_98 {dimension_numbers = #tpu.dot_dimension_numbers<[1], [0], [0], [1], [0, 0, 1, 1], [], []>} : vector<8x128xbf16>, vector<128x256xbf16>, vector<8x256xf32> -> vector<8x256xf32>
    %221 = vector.extract_strided_slice %220 {offsets = [0, 0], sizes = [8, 128], strides = [1, 1]} : vector<8x256xf32> to vector<8x128xf32>
    %c0_99 = arith.constant 0 : index
    %c1152 = arith.constant 1152 : index
    %222 = vector.load %arg3[%c0_99, %c1152] : memref<1x1280xf32, #tpu.memory_space<vmem>>, vector<1x128xf32>
    %223 = vector.broadcast %222 : vector<1x128xf32> to vector<8x128xf32>
    %224 = arith.addf %221, %223 : vector<8x128xf32>
    %225 = vector.extract_strided_slice %220 {offsets = [0, 128], sizes = [8, 128], strides = [1, 1]} : vector<8x256xf32> to vector<8x128xf32>
    %cst_100 = arith.constant dense<0xFF800000> : vector<8xf32>
    %226 = vector.multi_reduction <maximumf>, %224, %cst_100 [1] : vector<8x128xf32> to vector<8xf32>
    %227 = vector.shape_cast %226 : vector<8xf32> to vector<8x1xf32>
    %228 = vector.broadcast %227 : vector<8x1xf32> to vector<8x128xf32>
    %229 = arith.subf %224, %228 : vector<8x128xf32>
    %230 = math.exp %229 : vector<8x128xf32>
    %cst_101 = arith.constant dense<0.000000e+00> : vector<8xf32>
    %231 = vector.multi_reduction <add>, %230, %cst_101 [1] : vector<8x128xf32> to vector<8xf32>
    %232 = vector.shape_cast %231 : vector<8xf32> to vector<8x1xf32>
    %233 = tpu.reciprocal %232 {approx = true} : vector<8x1xf32> -> vector<8x1xf32>
    %234 = vector.broadcast %233 : vector<8x1xf32> to vector<8x128xf32>
    %235 = arith.mulf %230, %234 : vector<8x128xf32>
    %236 = arith.truncf %235 : vector<8x128xf32> to vector<8x128xbf16>
    %c0_102 = arith.constant 0 : index
    %c1152_103 = arith.constant 1152 : index
    %237 = vector.load %arg7[%c0_102, %c1152_103] : memref<8x1280xbf16, #tpu.memory_space<vmem>>, vector<8x128xbf16>
    tpu.vector_store %arg7[%c0_102, %c1152_103], %236 {strides = array<i32>} : memref<8x1280xbf16, #tpu.memory_space<vmem>>, vector<8x128xbf16>,
    %238 = arith.mulf %235, %225 : vector<8x128xf32>
    %239 = arith.truncf %238 : vector<8x128xf32> to vector<8x128xbf16>
    %c1152_104 = arith.constant 1152 : index
    %c0_105 = arith.constant 0 : index
    %240 = vector.load %arg4[%c1152_104, %c0_105] : memref<1280x128xbf16, #tpu.memory_space<vmem>>, vector<128x128xbf16>
    %cst_106 = arith.constant dense<0.000000e+00> : vector<8x128xf32>
    %241 = tpu.matmul %239, %240, %cst_106 {dimension_numbers = #tpu.dot_dimension_numbers<[1], [0], [0], [1], [0, 0, 1, 1], [], []>} : vector<8x128xbf16>, vector<128x128xbf16>, vector<8x128xf32> -> vector<8x128xf32>
    %242 = arith.addf %218, %241 : vector<8x128xf32>
    %c0_107 = arith.constant 0 : index
    %c0_108 = arith.constant 0 : index
    %243 = vector.load %arg5[%c0_107, %c0_108] : memref<1x128xf32, #tpu.memory_space<vmem>>, vector<1x128xf32>
    %244 = vector.broadcast %243 : vector<1x128xf32> to vector<8x128xf32>
    %245 = arith.addf %242, %244 : vector<8x128xf32>
    %c0_109 = arith.constant 0 : index
    %c0_110 = arith.constant 0 : index
    %246 = vector.load %arg6[%c0_109, %c0_110] : memref<8x128xf32, #tpu.memory_space<vmem>>, vector<8x128xf32>
    tpu.vector_store %arg6[%c0_109, %c0_110], %245 {strides = array<i32>} : memref<8x128xf32, #tpu.memory_space<vmem>>, vector<8x128xf32>,
    return
  }
  func.func @transform_0(%arg0: i32) -> (i32, i32) {
    %c0_i32 = arith.constant 0 : i32
    %c0_i32_0 = arith.constant 0 : i32
    return %arg0, %c0_i32 : i32, i32
  }
  func.func @transform_1(%arg0: i32) -> (i32, i32) {
    %c0_i32 = arith.constant 0 : i32
    %c0_i32_0 = arith.constant 0 : i32
    %c0_i32_1 = arith.constant 0 : i32
    return %c0_i32, %c0_i32_0 : i32, i32
  }
  func.func @transform_2(%arg0: i32) -> (i32, i32) {
    %c0_i32 = arith.constant 0 : i32
    %c0_i32_0 = arith.constant 0 : i32
    %c0_i32_1 = arith.constant 0 : i32
    return %c0_i32, %c0_i32_0 : i32, i32
  }
  func.func @transform_3(%arg0: i32) -> (i32, i32) {
    %c0_i32 = arith.constant 0 : i32
    %c0_i32_0 = arith.constant 0 : i32
    %c0_i32_1 = arith.constant 0 : i32
    return %c0_i32, %c0_i32_0 : i32, i32
  }
  func.func @transform_4(%arg0: i32) -> (i32, i32) {
    %c0_i32 = arith.constant 0 : i32
    %c0_i32_0 = arith.constant 0 : i32
    %c0_i32_1 = arith.constant 0 : i32
    return %c0_i32, %c0_i32_0 : i32, i32
  }
  func.func @transform_5(%arg0: i32) -> (i32, i32) {
    %c0_i32 = arith.constant 0 : i32
    %c0_i32_0 = arith.constant 0 : i32
    return %arg0, %c0_i32 : i32, i32
  }
  func.func @transform_6(%arg0: i32) -> (i32, i32) {
    %c0_i32 = arith.constant 0 : i32
    %c0_i32_0 = arith.constant 0 : i32
    return %arg0, %c0_i32 : i32, i32
  }
}

</mosaic_0001>

<llo_original>
// kernel: tpu_custom_call.1
$region0: #{tpu_custom_call.1}
  #allocation0 [shape = 'u32[]', space=smem, size = 0x4, offset = 0x4, fixed_abs, tag = 'smem constant byte address 0x4 - core index']
  #allocation1 [shape = 'u32[72,128]{1,0:T(1,128)}', space=vmem, size = 0x9000, scoped, tag = 'internal scratch']
  %s0 = inlined_call_operand.hbm [shape: f32[8,128], index: 0, kind: input, shape index: {}]
  %s1 = inlined_call_operand.hbm [shape: bf16[128,2560], index: 1, kind: input, shape index: {}]
  %s2 = inlined_call_operand.hbm [shape: f32[1,1280], index: 2, kind: input, shape index: {}]
  %s3 = inlined_call_operand.hbm [shape: bf16[1280,128], index: 3, kind: input, shape index: {}]
  %s4 = inlined_call_operand.vmem [shape: f32[1,128], index: 4, kind: input, shape index: {}]
  %s5 = inlined_call_operand.hbm [shape: f32[8,128], index: 5, kind: output, shape index: {0}]
  %s6 = inlined_call_operand.hbm [shape: bf16[8,1280], index: 6, kind: output, shape index: {1}]
  %7 = xla_tuple %s5, %s6
  %s8 = sld [smem:[#allocation0]]
  $region54: #{tpu_custom_call.1} parent=0
    _
  %s10 = ssub.s32 1, %s8
  %s11 = scalar_select 0, %s10, %s8
  $region1: #{tpu_custom_call.1} parent=0
    #allocation2 [shape = 'u8[4096]{0}', space=vmem, size = 0x1000, scoped, tag = 'input window, operand 0, single buffered']
    #allocation3 [shape = 's32[1]{0}', space=sflag, size = 0x4, scoped, tag = 'scoped memory for tpu_custom_call.1']
    #allocation4 [shape = 's32[1]{0}', space=sflag, size = 0x4, scoped, tag = 'scoped memory for tpu_custom_call.1']
    #allocation5 [shape = 'u8[655360]{0}', space=vmem, size = 0xa0000, scoped, tag = 'input window, operand 1, single buffered']
    #allocation6 [shape = 's32[1]{0}', space=sflag, size = 0x4, scoped, tag = 'scoped memory for tpu_custom_call.1']
    #allocation7 [shape = 'u8[5120]{0}', space=vmem, size = 0x1400, scoped, tag = 'input window, operand 2, single buffered']
    #allocation8 [shape = 'u8[327680]{0}', space=vmem, size = 0x50000, scoped, tag = 'input window, operand 3, single buffered']
    #allocation9 [shape = 's32[1]{0}', space=sflag, size = 0x4, scoped, tag = 'scoped memory for tpu_custom_call.1']
    #allocation10 [shape = 'u8[4096]{0}', space=vmem, size = 0x1000, scoped, tag = 'output window, operand 0, single buffered']
    #allocation11 [shape = 'u8[20480]{0}', space=vmem, size = 0x5000, scoped, tag = 'output window, operand 1, single buffered']
    #allocation12 [shape = 's32[1]{0}', space=sflag, size = 0x4, scoped, tag = 'scoped memory for tpu_custom_call.1']
    %12 = vsyncpa [#allocation3], 0
    %13 = vsyncpa [#allocation6], 0
    %14 = vsyncpa [#allocation9], 0
    %15 = vsyncpa [#allocation4], 0
    %16 = vsyncpa [#allocation12], 0
    // Predicated region
    $region2: #{tpu_custom_call.1} parent=1 // pred_check
      _
    $region3: #{tpu_custom_call.1} parent=1 // pred_check_branch
      %18 = sbr.rel (0) target = $region5
    $region4: #{tpu_custom_call.1} parent=1 // pred_region
      %20 = vsyncadd [#allocation3], 0
      %s22 = sshll.u32 %s0, 4
      %s23 = int_to_ptr.hbm [resolvable:$true] %s22
      %s24 = sshll.u32 [#allocation2], 4
      %s25 = int_to_ptr.vmem [resolvable:$true] %s24
      %27 = dma.hbm_to_vmem [thread:$0]  %s23, 128, %s25, [#allocation3]
    $region5: #{tpu_custom_call.1} parent=1 // pred_fallthru
      _
    // Predicated region
    $region6: #{tpu_custom_call.1} parent=1 // pred_check
      _
    $region7: #{tpu_custom_call.1} parent=1 // pred_check_branch
      %29 = sbr.rel (0) target = $region9
    $region8: #{tpu_custom_call.1} parent=1 // pred_region
      %31 = vsyncadd [#allocation6], 0
      %s32 = sshll.u32 %s1, 4
      %s33 = int_to_ptr.hbm [resolvable:$true] %s32
      %s34 = sshll.u32 [#allocation5], 4
      %s35 = int_to_ptr.vmem [resolvable:$true] %s34
      %40 = dma.hbm_to_vmem [thread:$0]  %s33, 20480, %s35, [#allocation6], 1280, 1280, 80
    $region9: #{tpu_custom_call.1} parent=1 // pred_fallthru
      _
    // Predicated region
    $region10: #{tpu_custom_call.1} parent=1 // pred_check
      _
    $region11: #{tpu_custom_call.1} parent=1 // pred_check_branch
      %42 = sbr.rel (0) target = $region13
    $region12: #{tpu_custom_call.1} parent=1 // pred_region
      %44 = vsyncadd [#allocation6], 0
      %s46 = sshll.u32 %s2, 4
      %s47 = int_to_ptr.hbm [resolvable:$true] %s46
      %s48 = sshll.u32 [#allocation7], 4
      %s49 = int_to_ptr.vmem [resolvable:$true] %s48
      %51 = dma.hbm_to_vmem [thread:$0]  %s47, 160, %s49, [#allocation6]
    $region13: #{tpu_custom_call.1} parent=1 // pred_fallthru
      _
    // Predicated region
    $region14: #{tpu_custom_call.1} parent=1 // pred_check
      _
    $region15: #{tpu_custom_call.1} parent=1 // pred_check_branch
      %53 = sbr.rel (0) target = $region17
    $region16: #{tpu_custom_call.1} parent=1 // pred_region
      %55 = vsyncadd [#allocation9], 0
      %s56 = sshll.u32 %s3, 4
      %s57 = int_to_ptr.hbm [resolvable:$true] %s56
      %s58 = sshll.u32 [#allocation8], 4
      %s59 = int_to_ptr.vmem [resolvable:$true] %s58
      %64 = dma.hbm_to_vmem [thread:$0]  %s57, 10240, %s59, [#allocation9], 64, 64, 4
    $region17: #{tpu_custom_call.1} parent=1 // pred_fallthru
      _
    // Predicated region
    $region18: #{tpu_custom_call.1} parent=1 // pred_check
      _
    $region19: #{tpu_custom_call.1} parent=1 // pred_check_branch
      %66 = sbr.rel (0) target = $region21
    $region20: #{tpu_custom_call.1} parent=1 // pred_region
      _
    $region21: #{tpu_custom_call.1} parent=1 // pred_fallthru
      _
    // Predicated region
    $region22: #{tpu_custom_call.1} parent=1 // pred_check
      _
    $region23: #{tpu_custom_call.1} parent=1 // pred_check_branch
      %68 = sbr.rel (0) target = $region25
    $region24: #{tpu_custom_call.1} parent=1 // pred_region
      %70 = dma.done [#allocation3], 128
    $region25: #{tpu_custom_call.1} parent=1 // pred_fallthru
      _
    // Predicated region
    $region26: #{tpu_custom_call.1} parent=1 // pred_check
      _
    $region27: #{tpu_custom_call.1} parent=1 // pred_check_branch
      %72 = sbr.rel (0) target = $region29
    $region28: #{tpu_custom_call.1} parent=1 // pred_region
      %74 = dma.done [#allocation6], 20480
    $region29: #{tpu_custom_call.1} parent=1 // pred_fallthru
      _
    // Predicated region
    $region30: #{tpu_custom_call.1} parent=1 // pred_check
      _
    $region31: #{tpu_custom_call.1} parent=1 // pred_check_branch
      %76 = sbr.rel (0) target = $region33
    $region32: #{tpu_custom_call.1} parent=1 // pred_region
      %78 = dma.done [#allocation6], 160
    $region33: #{tpu_custom_call.1} parent=1 // pred_fallthru
      _
    // Predicated region
    $region34: #{tpu_custom_call.1} parent=1 // pred_check
      _
    $region35: #{tpu_custom_call.1} parent=1 // pred_check_branch
      %80 = sbr.rel (0) target = $region37
    $region36: #{tpu_custom_call.1} parent=1 // pred_region
      %82 = dma.done [#allocation9], 10240
    $region37: #{tpu_custom_call.1} parent=1 // pred_fallthru
      _
    %v83 = vld [vmem:[#allocation2] sm:$0xff]
    %v84 = vpack.c.bf16 %v83, %v83
    %v85 = vld [vmem:[#allocation5] sm:$0xff]
    %v86 = vld [vmem:[#allocation5 + $0x50] sm:$0xff]
    %v87 = vld [vmem:[#allocation5 + $0xa0] sm:$0xff]
    %v88 = vld [vmem:[#allocation5 + $0xf0] sm:$0xff]
    %v89 = vld [vmem:[#allocation5 + $0x140] sm:$0xff]
    %v90 = vld [vmem:[#allocation5 + $0x190] sm:$0xff]
    %v91 = vld [vmem:[#allocation5 + $0x1e0] sm:$0xff]
    %v92 = vld [vmem:[#allocation5 + $0x230] sm:$0xff]
    %v93 = vld [vmem:[#allocation5 + $0x280] sm:$0xff]
    %v94 = vld [vmem:[#allocation5 + $0x2d0] sm:$0xff]
    %v95 = vld [vmem:[#allocation5 + $0x320] sm:$0xff]
    %v96 = vld [vmem:[#allocation5 + $0x370] sm:$0xff]
    %v97 = vld [vmem:[#allocation5 + $0x3c0] sm:$0xff]
    %v98 = vld [vmem:[#allocation5 + $0x410] sm:$0xff]
    %v99 = vld [vmem:[#allocation5 + $0x460] sm:$0xff]
    %v100 = vld [vmem:[#allocation5 + $0x4b0] sm:$0xff]
    %v117 = vunpack.c.l.b16 %v85
    %v118 = vunpack.c.h.b16 %v85
    %v119 = vunpack.c.l.b16 %v86
    %v120 = vunpack.c.h.b16 %v86
    %v121 = vunpack.c.l.b16 %v87
    %v122 = vunpack.c.h.b16 %v87
    %v123 = vunpack.c.l.b16 %v88
    %v124 = vunpack.c.h.b16 %v88
    %v125 = vunpack.c.l.b16 %v89
    %v126 = vunpack.c.h.b16 %v89
    %v127 = vunpack.c.l.b16 %v90
    %v128 = vunpack.c.h.b16 %v90
    %v129 = vunpack.c.l.b16 %v91
    %v130 = vunpack.c.h.b16 %v91
    %v131 = vunpack.c.l.b16 %v92
    %v132 = vunpack.c.h.b16 %v92
    %v133 = vunpack.c.l.b16 %v93
    %v134 = vunpack.c.h.b16 %v93
    %v135 = vunpack.c.l.b16 %v94
    %v136 = vunpack.c.h.b16 %v94
    %v137 = vunpack.c.l.b16 %v95
    %v138 = vunpack.c.h.b16 %v95
    %v139 = vunpack.c.l.b16 %v96
    %v140 = vunpack.c.h.b16 %v96
    %v141 = vunpack.c.l.b16 %v97
    %v142 = vunpack.c.h.b16 %v97
    %v143 = vunpack.c.l.b16 %v98
    %v144 = vunpack.c.h.b16 %v98
    %v145 = vunpack.c.l.b16 %v99
    %v146 = vunpack.c.h.b16 %v99
    %v147 = vunpack.c.l.b16 %v100
    %v148 = vunpack.c.h.b16 %v100
    %v149 = vpack.c.b16 %v119, %v117
    %v150 = vpack.c.b16 %v120, %v118
    %v151 = vpack.c.b16 %v123, %v121
    %v152 = vpack.c.b16 %v124, %v122
    %v153 = vpack.c.b16 %v127, %v125
    %v154 = vpack.c.b16 %v128, %v126
    %v155 = vpack.c.b16 %v131, %v129
    %v156 = vpack.c.b16 %v132, %v130
    %v157 = vpack.c.b16 %v135, %v133
    %v158 = vpack.c.b16 %v136, %v134
    %v159 = vpack.c.b16 %v139, %v137
    %v160 = vpack.c.b16 %v140, %v138
    %v161 = vpack.c.b16 %v143, %v141
    %v162 = vpack.c.b16 %v144, %v142
    %v163 = vpack.c.b16 %v147, %v145
    %v164 = vpack.c.b16 %v148, %v146
    %181 = vmatpush.bf16.msra.mxu0 %v163
    %182 = vmatpush.bf16.msra.mxu0 %v161
    %183 = vmatpush.bf16.msra.mxu0 %v159
    %184 = vmatpush.bf16.msra.mxu0 %v157
    %185 = vmatpush.bf16.msra.mxu0 %v155
    %186 = vmatpush.bf16.msra.mxu0 %v153
    %187 = vmatpush.bf16.msra.mxu0 %v151
    %188 = vmatpush.bf16.msra.mxu0 %v149
    %189 = vmatmul.bf16.gmra.mxu0 %v84
    %v190 = vpop.f32.mrf.mxu0
    %v191 = vadd.f32 0.0, %v190
    %v192 = vpop.f32.mrf.mxu0
    %193 = vdwg.mxu0
    %194 = vmatpush.bf16.msra.mxu0 %v164
    %195 = vmatpush.bf16.msra.mxu0 %v162
    %196 = vmatpush.bf16.msra.mxu0 %v160
    %197 = vmatpush.bf16.msra.mxu0 %v158
    %198 = vmatpush.bf16.msra.mxu0 %v156
    %199 = vmatpush.bf16.msra.mxu0 %v154
    %200 = vmatpush.bf16.msra.mxu0 %v152
    %201 = vmatpush.bf16.msra.mxu0 %v150
    %202 = vmatmul.bf16.gmra.mxu0 %v84
    %v203 = vpop.f32.mrf.mxu0
    %v204 = vadd.f32 0.0, %v203
    %v205 = vpop.f32.mrf.mxu0
    %206 = vdwg.mxu0
    %v207 = vld [vmem:[#allocation7] sm:$0x1]
    %v209 = vperm.slane %v207, 0
    %v211 = vadd.f32 %v191, %v209
    %212 = vmax.xlane.f32.xlu0 %v211
    %v213 = vpop.xlane.xlu0 %212
    %v214 = vsub.f32 %v211, %v213
    %v215 = vmul.f32 %v214, 1.442695
    %v216 = vpow.pop %v215
    %217 = vadd.xlane.f32.xlu0 %v216
    %v218 = vpop.xlane.xlu0 %217
    %v219 = vrcp.pop %v218
    %v220 = vmul.f32 %v216, %v219
    %v221 = vpack.c.bf16 %v220, %v220
    %222 = vst [vmem:[#allocation11] sm:$0xf] %v221
    %v223 = vmul.f32 %v220, %v204
    %v224 = vpack.c.bf16 %v223, %v223
    %v225 = vld [vmem:[#allocation8] sm:$0xf]
    %v226 = vld [vmem:[#allocation8 + $0x4] sm:$0xf]
    %v227 = vld [vmem:[#allocation8 + $0x8] sm:$0xf]
    %v228 = vld [vmem:[#allocation8 + $0xc] sm:$0xf]
    %v229 = vld [vmem:[#allocation8 + $0x10] sm:$0xf]
    %v230 = vld [vmem:[#allocation8 + $0x14] sm:$0xf]
    %v231 = vld [vmem:[#allocation8 + $0x18] sm:$0xf]
    %v232 = vld [vmem:[#allocation8 + $0x1c] sm:$0xf]
    %v233 = vld [vmem:[#allocation8 + $0x20] sm:$0xf]
    %v234 = vld [vmem:[#allocation8 + $0x24] sm:$0xf]
    %v235 = vld [vmem:[#allocation8 + $0x28] sm:$0xf]
    %v236 = vld [vmem:[#allocation8 + $0x2c] sm:$0xf]
    %v237 = vld [vmem:[#allocation8 + $0x30] sm:$0xf]
    %v238 = vld [vmem:[#allocation8 + $0x34] sm:$0xf]
    %v239 = vld [vmem:[#allocation8 + $0x38] sm:$0xf]
    %v240 = vld [vmem:[#allocation8 + $0x3c] sm:$0xf]
    %v241 = vld [vmem:[#allocation5 + $0x8] sm:$0xff]
    %v242 = vld [vmem:[#allocation5 + $0x58] sm:$0xff]
    %v243 = vld [vmem:[#allocation5 + $0xa8] sm:$0xff]
    %v244 = vld [vmem:[#allocation5 + $0xf8] sm:$0xff]
    %v245 = vld [vmem:[#allocation5 + $0x148] sm:$0xff]
    %v246 = vld [vmem:[#allocation5 + $0x198] sm:$0xff]
    %v247 = vld [vmem:[#allocation5 + $0x1e8] sm:$0xff]
    %v248 = vld [vmem:[#allocation5 + $0x238] sm:$0xff]
    %v249 = vld [vmem:[#allocation5 + $0x288] sm:$0xff]
    %v250 = vld [vmem:[#allocation5 + $0x2d8] sm:$0xff]
    %v251 = vld [vmem:[#allocation5 + $0x328] sm:$0xff]
    %v252 = vld [vmem:[#allocation5 + $0x378] sm:$0xff]
    %v253 = vld [vmem:[#allocation5 + $0x3c8] sm:$0xff]
    %v254 = vld [vmem:[#allocation5 + $0x418] sm:$0xff]
    %v255 = vld [vmem:[#allocation5 + $0x468] sm:$0xff]
    %v256 = vld [vmem:[#allocation5 + $0x4b8] sm:$0xff]
    %v273 = vunpack.c.l.b16 %v241
    %v274 = vunpack.c.h.b16 %v241
    %v275 = vunpack.c.l.b16 %v242
    %v276 = vunpack.c.h.b16 %v242
    %v277 = vunpack.c.l.b16 %v243
    %v278 = vunpack.c.h.b16 %v243
    %v279 = vunpack.c.l.b16 %v244
    %v280 = vunpack.c.h.b16 %v244
    %v281 = vunpack.c.l.b16 %v245
    %v282 = vunpack.c.h.b16 %v245
    %v283 = vunpack.c.l.b16 %v246
    %v284 = vunpack.c.h.b16 %v246
    %v285 = vunpack.c.l.b16 %v247
    %v286 = vunpack.c.h.b16 %v247
    %v287 = vunpack.c.l.b16 %v248
    %v288 = vunpack.c.h.b16 %v248
    %v289 = vunpack.c.l.b16 %v249
    %v290 = vunpack.c.h.b16 %v249
    %v291 = vunpack.c.l.b16 %v250
    %v292 = vunpack.c.h.b16 %v250
    %v293 = vunpack.c.l.b16 %v251
    %v294 = vunpack.c.h.b16 %v251
    %v295 = vunpack.c.l.b16 %v252
    %v296 = vunpack.c.h.b16 %v252
    %v297 = vunpack.c.l.b16 %v253
    %v298 = vunpack.c.h.b16 %v253
    %v299 = vunpack.c.l.b16 %v254
    %v300 = vunpack.c.h.b16 %v254
    %v301 = vunpack.c.l.b16 %v255
    %v302 = vunpack.c.h.b16 %v255
    %v303 = vunpack.c.l.b16 %v256
    %v304 = vunpack.c.h.b16 %v256
    %v305 = vpack.c.b16 %v275, %v273
    %v306 = vpack.c.b16 %v276, %v274
    %v307 = vpack.c.b16 %v279, %v277
    %v308 = vpack.c.b16 %v280, %v278
    %v309 = vpack.c.b16 %v283, %v281
    %v310 = vpack.c.b16 %v284, %v282
    %v311 = vpack.c.b16 %v287, %v285
    %v312 = vpack.c.b16 %v288, %v286
    %v313 = vpack.c.b16 %v291, %v289
    %v314 = vpack.c.b16 %v292, %v290
    %v315 = vpack.c.b16 %v295, %v293
    %v316 = vpack.c.b16 %v296, %v294
    %v317 = vpack.c.b16 %v299, %v297
    %v318 = vpack.c.b16 %v300, %v298
    %v319 = vpack.c.b16 %v303, %v301
    %v320 = vpack.c.b16 %v304, %v302
    %337 = vmatpush.bf16.msra.mxu0 %v319
    %338 = vmatpush.bf16.msra.mxu0 %v317
    %339 = vmatpush.bf16.msra.mxu0 %v315
    %340 = vmatpush.bf16.msra.mxu0 %v313
    %341 = vmatpush.bf16.msra.mxu0 %v311
    %342 = vmatpush.bf16.msra.mxu0 %v309
    %343 = vmatpush.bf16.msra.mxu0 %v307
    %344 = vmatpush.bf16.msra.mxu0 %v305
    %345 = vmatmul.bf16.gmra.mxu0 %v84
    %v346 = vpop.f32.mrf.mxu0
    %v347 = vadd.f32 0.0, %v346
    %v348 = vpop.f32.mrf.mxu0
    %349 = vdwg.mxu0
    %350 = vmatpush.bf16.msra.mxu0 %v320
    %351 = vmatpush.bf16.msra.mxu0 %v318
    %352 = vmatpush.bf16.msra.mxu0 %v316
    %353 = vmatpush.bf16.msra.mxu0 %v314
    %354 = vmatpush.bf16.msra.mxu0 %v312
    %355 = vmatpush.bf16.msra.mxu0 %v310
    %356 = vmatpush.bf16.msra.mxu0 %v308
    %357 = vmatpush.bf16.msra.mxu0 %v306
    %358 = vmatmul.bf16.gmra.mxu0 %v84
    %v359 = vpop.f32.mrf.mxu0
    %v360 = vadd.f32 0.0, %v359
    %v361 = vpop.f32.mrf.mxu0
    %362 = vdwg.mxu0
    %v363 = vld [vmem:[#allocation7 + $0x1] sm:$0x1]
    %v365 = vperm.slane %v363, 0
    %v367 = vadd.f32 %v347, %v365
    %368 = vmax.xlane.f32.xlu0 %v367
    %v369 = vpop.xlane.xlu0 %368
    %v370 = vsub.f32 %v367, %v369
    %v371 = vmul.f32 %v370, 1.442695
    %v372 = vpow.pop %v371
    %373 = vadd.xlane.f32.xlu0 %v372
    %v374 = vpop.xlane.xlu0 %373
    %v375 = vrcp.pop %v374
    %v376 = vmul.f32 %v372, %v375
    %v377 = vpack.c.bf16 %v376, %v376
    %378 = vst [vmem:[#allocation11 + $0x4] sm:$0xf] %v377
    %v379 = vmul.f32 %v376, %v360
    %v380 = vpack.c.bf16 %v379, %v379
    %v381 = vld [vmem:[#allocation8 + $0x40] sm:$0xf]
    %v382 = vld [vmem:[#allocation8 + $0x44] sm:$0xf]
    %v383 = vld [vmem:[#allocation8 + $0x48] sm:$0xf]
    %v384 = vld [vmem:[#allocation8 + $0x4c] sm:$0xf]
    %v385 = vld [vmem:[#allocation8 + $0x50] sm:$0xf]
    %v386 = vld [vmem:[#allocation8 + $0x54] sm:$0xf]
    %v387 = vld [vmem:[#allocation8 + $0x58] sm:$0xf]
    %v388 = vld [vmem:[#allocation8 + $0x5c] sm:$0xf]
    %v389 = vld [vmem:[#allocation8 + $0x60] sm:$0xf]
    %v390 = vld [vmem:[#allocation8 + $0x64] sm:$0xf]
    %v391 = vld [vmem:[#allocation8 + $0x68] sm:$0xf]
    %v392 = vld [vmem:[#allocation8 + $0x6c] sm:$0xf]
    %v393 = vld [vmem:[#allocation8 + $0x70] sm:$0xf]
    %v394 = vld [vmem:[#allocation8 + $0x74] sm:$0xf]
    %v395 = vld [vmem:[#allocation8 + $0x78] sm:$0xf]
    %v396 = vld [vmem:[#allocation8 + $0x7c] sm:$0xf]
    %v413 = vunpack.c.l.b16 %v381
    %v414 = vunpack.c.l.b16 %v382
    %v415 = vunpack.c.l.b16 %v383
    %v416 = vunpack.c.l.b16 %v384
    %v417 = vunpack.c.l.b16 %v385
    %v418 = vunpack.c.l.b16 %v386
    %v419 = vunpack.c.l.b16 %v387
    %v420 = vunpack.c.l.b16 %v388
    %v421 = vunpack.c.l.b16 %v389
    %v422 = vunpack.c.l.b16 %v390
    %v423 = vunpack.c.l.b16 %v391
    %v424 = vunpack.c.l.b16 %v392
    %v425 = vunpack.c.l.b16 %v393
    %v426 = vunpack.c.l.b16 %v394
    %v427 = vunpack.c.l.b16 %v395
    %v428 = vunpack.c.l.b16 %v396
    %v429 = vpack.c.b16 %v414, %v413
    %v430 = vpack.c.b16 %v416, %v415
    %v431 = vpack.c.b16 %v418, %v417
    %v432 = vpack.c.b16 %v420, %v419
    %v433 = vpack.c.b16 %v422, %v421
    %v434 = vpack.c.b16 %v424, %v423
    %v435 = vpack.c.b16 %v426, %v425
    %v436 = vpack.c.b16 %v428, %v427
    %445 = vmatpush.bf16.msra.mxu0 %v436
    %446 = vmatpush.bf16.msra.mxu0 %v435
    %447 = vmatpush.bf16.msra.mxu0 %v434
    %448 = vmatpush.bf16.msra.mxu0 %v433
    %449 = vmatpush.bf16.msra.mxu0 %v432
    %450 = vmatpush.bf16.msra.mxu0 %v431
    %451 = vmatpush.bf16.msra.mxu0 %v430
    %452 = vmatpush.bf16.msra.mxu0 %v429
    %453 = vmatmul.bf16.gmra.mxu0 %v380
    %v454 = vpop.f32.mrf.mxu0
    %v455 = vadd.f32 0.0, %v454
    %v456 = vpop.f32.mrf.mxu0
    %457 = vdwg.mxu0
    %v474 = vunpack.c.l.b16 %v225
    %v475 = vunpack.c.l.b16 %v226
    %v476 = vunpack.c.l.b16 %v227
    %v477 = vunpack.c.l.b16 %v228
    %v478 = vunpack.c.l.b16 %v229
    %v479 = vunpack.c.l.b16 %v230
    %v480 = vunpack.c.l.b16 %v231
    %v481 = vunpack.c.l.b16 %v232
    %v482 = vunpack.c.l.b16 %v233
    %v483 = vunpack.c.l.b16 %v234
    %v484 = vunpack.c.l.b16 %v235
    %v485 = vunpack.c.l.b16 %v236
    %v486 = vunpack.c.l.b16 %v237
    %v487 = vunpack.c.l.b16 %v238
    %v488 = vunpack.c.l.b16 %v239
    %v489 = vunpack.c.l.b16 %v240
    %v490 = vpack.c.b16 %v475, %v474
    %v491 = vpack.c.b16 %v477, %v476
    %v492 = vpack.c.b16 %v479, %v478
    %v493 = vpack.c.b16 %v481, %v480
    %v494 = vpack.c.b16 %v483, %v482
    %v495 = vpack.c.b16 %v485, %v484
    %v496 = vpack.c.b16 %v487, %v486
    %v497 = vpack.c.b16 %v489, %v488
    %506 = vmatpush.bf16.msra.mxu0 %v497
    %507 = vmatpush.bf16.msra.mxu0 %v496
    %508 = vmatpush.bf16.msra.mxu0 %v495
    %509 = vmatpush.bf16.msra.mxu0 %v494
    %510 = vmatpush.bf16.msra.mxu0 %v493
    %511 = vmatpush.bf16.msra.mxu0 %v492
    %512 = vmatpush.bf16.msra.mxu0 %v491
    %513 = vmatpush.bf16.msra.mxu0 %v490
    %514 = vmatmul.bf16.gmra.mxu0 %v224
    %v515 = vpop.f32.mrf.mxu0
    %v516 = vadd.f32 %v455, %v515
    %v517 = vpop.f32.mrf.mxu0
    %518 = vdwg.mxu0
    %v519 = vld [vmem:[#allocation5 + $0x10] sm:$0xff]
    %v520 = vld [vmem:[#allocation5 + $0x60] sm:$0xff]
    %v521 = vld [vmem:[#allocation5 + $0xb0] sm:$0xff]
    %v522 = vld [vmem:[#allocation5 + $0x100] sm:$0xff]
    %v523 = vld [vmem:[#allocation5 + $0x150] sm:$0xff]
    %v524 = vld [vmem:[#allocation5 + $0x1a0] sm:$0xff]
    %v525 = vld [vmem:[#allocation5 + $0x1f0] sm:$0xff]
    %v526 = vld [vmem:[#allocation5 + $0x240] sm:$0xff]
    %v527 = vld [vmem:[#allocation5 + $0x290] sm:$0xff]
    %v528 = vld [vmem:[#allocation5 + $0x2e0] sm:$0xff]
    %v529 = vld [vmem:[#allocation5 + $0x330] sm:$0xff]
    %v530 = vld [vmem:[#allocation5 + $0x380] sm:$0xff]
    %v531 = vld [vmem:[#allocation5 + $0x3d0] sm:$0xff]
    %v532 = vld [vmem:[#allocation5 + $0x420] sm:$0xff]
    %v533 = vld [vmem:[#allocation5 + $0x470] sm:$0xff]
    %v534 = vld [vmem:[#allocation5 + $0x4c0] sm:$0xff]
    %v551 = vunpack.c.l.b16 %v519
    %v552 = vunpack.c.h.b16 %v519
    %v553 = vunpack.c.l.b16 %v520
    %v554 = vunpack.c.h.b16 %v520
    %v555 = vunpack.c.l.b16 %v521
    %v556 = vunpack.c.h.b16 %v521
    %v557 = vunpack.c.l.b16 %v522
    %v558 = vunpack.c.h.b16 %v522
    %v559 = vunpack.c.l.b16 %v523
    %v560 = vunpack.c.h.b16 %v523
    %v561 = vunpack.c.l.b16 %v524
    %v562 = vunpack.c.h.b16 %v524
    %v563 = vunpack.c.l.b16 %v525
    %v564 = vunpack.c.h.b16 %v525
    %v565 = vunpack.c.l.b16 %v526
    %v566 = vunpack.c.h.b16 %v526
    %v567 = vunpack.c.l.b16 %v527
    %v568 = vunpack.c.h.b16 %v527
    %v569 = vunpack.c.l.b16 %v528
    %v570 = vunpack.c.h.b16 %v528
    %v571 = vunpack.c.l.b16 %v529
    %v572 = vunpack.c.h.b16 %v529
    %v573 = vunpack.c.l.b16 %v530
    %v574 = vunpack.c.h.b16 %v530
    %v575 = vunpack.c.l.b16 %v531
    %v576 = vunpack.c.h.b16 %v531
    %v577 = vunpack.c.l.b16 %v532
    %v578 = vunpack.c.h.b16 %v532
    %v579 = vunpack.c.l.b16 %v533
    %v580 = vunpack.c.h.b16 %v533
    %v581 = vunpack.c.l.b16 %v534
    %v582 = vunpack.c.h.b16 %v534
    %v583 = vpack.c.b16 %v553, %v551
    %v584 = vpack.c.b16 %v554, %v552
    %v585 = vpack.c.b16 %v557, %v555
    %v586 = vpack.c.b16 %v558, %v556
    %v587 = vpack.c.b16 %v561, %v559
    %v588 = vpack.c.b16 %v562, %v560
    %v589 = vpack.c.b16 %v565, %v563
    %v590 = vpack.c.b16 %v566, %v564
    %v591 = vpack.c.b16 %v569, %v567
    %v592 = vpack.c.b16 %v570, %v568
    %v593 = vpack.c.b16 %v573, %v571
    %v594 = vpack.c.b16 %v574, %v572
    %v595 = vpack.c.b16 %v577, %v575
    %v596 = vpack.c.b16 %v578, %v576
    %v597 = vpack.c.b16 %v581, %v579
    %v598 = vpack.c.b16 %v582, %v580
    %615 = vmatpush.bf16.msra.mxu0 %v597
    %616 = vmatpush.bf16.msra.mxu0 %v595
    %617 = vmatpush.bf16.msra.mxu0 %v593
    %618 = vmatpush.bf16.msra.mxu0 %v591
    %619 = vmatpush.bf16.msra.mxu0 %v589
    %620 = vmatpush.bf16.msra.mxu0 %v587
    %621 = vmatpush.bf16.msra.mxu0 %v585
    %622 = vmatpush.bf16.msra.mxu0 %v583
    %623 = vmatmul.bf16.gmra.mxu0 %v84
    %v624 = vpop.f32.mrf.mxu0
    %v625 = vadd.f32 0.0, %v624
    %v626 = vpop.f32.mrf.mxu0
    %627 = vdwg.mxu0
    %628 = vmatpush.bf16.msra.mxu0 %v598
    %629 = vmatpush.bf16.msra.mxu0 %v596
    %630 = vmatpush.bf16.msra.mxu0 %v594
    %631 = vmatpush.bf16.msra.mxu0 %v592
    %632 = vmatpush.bf16.msra.mxu0 %v590
    %633 = vmatpush.bf16.msra.mxu0 %v588
    %634 = vmatpush.bf16.msra.mxu0 %v586
    %635 = vmatpush.bf16.msra.mxu0 %v584
    %636 = vmatmul.bf16.gmra.mxu0 %v84
    %v637 = vpop.f32.mrf.mxu0
    %v638 = vadd.f32 0.0, %v637
    %v639 = vpop.f32.mrf.mxu0
    %640 = vdwg.mxu0
    %v641 = vld [vmem:[#allocation7 + $0x2] sm:$0x1]
    %v643 = vperm.slane %v641, 0
    %v645 = vadd.f32 %v625, %v643
    %646 = vmax.xlane.f32.xlu0 %v645
    %v647 = vpop.xlane.xlu0 %646
    %v648 = vsub.f32 %v645, %v647
    %v649 = vmul.f32 %v648, 1.442695
    %v650 = vpow.pop %v649
    %651 = vadd.xlane.f32.xlu0 %v650
    %v652 = vpop.xlane.xlu0 %651
    %v653 = vrcp.pop %v652
    %v654 = vmul.f32 %v650, %v653
    %v655 = vpack.c.bf16 %v654, %v654
    %656 = vst [vmem:[#allocation11 + $0x8] sm:$0xf] %v655
    %v657 = vmul.f32 %v654, %v638
    %v658 = vpack.c.bf16 %v657, %v657
    %v659 = vld [vmem:[#allocation8 + $0x80] sm:$0xf]
    %v660 = vld [vmem:[#allocation8 + $0x84] sm:$0xf]
    %v661 = vld [vmem:[#allocation8 + $0x88] sm:$0xf]
    %v662 = vld [vmem:[#allocation8 + $0x8c] sm:$0xf]
    %v663 = vld [vmem:[#allocation8 + $0x90] sm:$0xf]
    %v664 = vld [vmem:[#allocation8 + $0x94] sm:$0xf]
    %v665 = vld [vmem:[#allocation8 + $0x98] sm:$0xf]
    %v666 = vld [vmem:[#allocation8 + $0x9c] sm:$0xf]
    %v667 = vld [vmem:[#allocation8 + $0xa0] sm:$0xf]
    %v668 = vld [vmem:[#allocation8 + $0xa4] sm:$0xf]
    %v669 = vld [vmem:[#allocation8 + $0xa8] sm:$0xf]
    %v670 = vld [vmem:[#allocation8 + $0xac] sm:$0xf]
    %v671 = vld [vmem:[#allocation8 + $0xb0] sm:$0xf]
    %v672 = vld [vmem:[#allocation8 + $0xb4] sm:$0xf]
    %v673 = vld [vmem:[#allocation8 + $0xb8] sm:$0xf]
    %v674 = vld [vmem:[#allocation8 + $0xbc] sm:$0xf]
    %v691 = vunpack.c.l.b16 %v659
    %v692 = vunpack.c.l.b16 %v660
    %v693 = vunpack.c.l.b16 %v661
    %v694 = vunpack.c.l.b16 %v662
    %v695 = vunpack.c.l.b16 %v663
    %v696 = vunpack.c.l.b16 %v664
    %v697 = vunpack.c.l.b16 %v665
    %v698 = vunpack.c.l.b16 %v666
    %v699 = vunpack.c.l.b16 %v667
    %v700 = vunpack.c.l.b16 %v668
    %v701 = vunpack.c.l.b16 %v669
    %v702 = vunpack.c.l.b16 %v670
    %v703 = vunpack.c.l.b16 %v671
    %v704 = vunpack.c.l.b16 %v672
    %v705 = vunpack.c.l.b16 %v673
    %v706 = vunpack.c.l.b16 %v674
    %v707 = vpack.c.b16 %v692, %v691
    %v708 = vpack.c.b16 %v694, %v693
    %v709 = vpack.c.b16 %v696, %v695
    %v710 = vpack.c.b16 %v698, %v697
    %v711 = vpack.c.b16 %v700, %v699
    %v712 = vpack.c.b16 %v702, %v701
    %v713 = vpack.c.b16 %v704, %v703
    %v714 = vpack.c.b16 %v706, %v705
    %723 = vmatpush.bf16.msra.mxu0 %v714
    %724 = vmatpush.bf16.msra.mxu0 %v713
    %725 = vmatpush.bf16.msra.mxu0 %v712
    %726 = vmatpush.bf16.msra.mxu0 %v711
    %727 = vmatpush.bf16.msra.mxu0 %v710
    %728 = vmatpush.bf16.msra.mxu0 %v709
    %729 = vmatpush.bf16.msra.mxu0 %v708
    %730 = vmatpush.bf16.msra.mxu0 %v707
    %731 = vmatmul.bf16.gmra.mxu0 %v658
    %v732 = vpop.f32.mrf.mxu0
    %v733 = vadd.f32 0.0, %v732
    %v734 = vpop.f32.mrf.mxu0
    %735 = vdwg.mxu0
    %v736 = vadd.f32 %v516, %v733
    %v737 = vld [vmem:[#allocation5 + $0x18] sm:$0xff]
    %v738 = vld [vmem:[#allocation5 + $0x68] sm:$0xff]
    %v739 = vld [vmem:[#allocation5 + $0xb8] sm:$0xff]
    %v740 = vld [vmem:[#allocation5 + $0x108] sm:$0xff]
    %v741 = vld [vmem:[#allocation5 + $0x158] sm:$0xff]
    %v742 = vld [vmem:[#allocation5 + $0x1a8] sm:$0xff]
    %v743 = vld [vmem:[#allocation5 + $0x1f8] sm:$0xff]
    %v744 = vld [vmem:[#allocation5 + $0x248] sm:$0xff]
    %v745 = vld [vmem:[#allocation5 + $0x298] sm:$0xff]
    %v746 = vld [vmem:[#allocation5 + $0x2e8] sm:$0xff]
    %v747 = vld [vmem:[#allocation5 + $0x338] sm:$0xff]
    %v748 = vld [vmem:[#allocation5 + $0x388] sm:$0xff]
    %v749 = vld [vmem:[#allocation5 + $0x3d8] sm:$0xff]
    %v750 = vld [vmem:[#allocation5 + $0x428] sm:$0xff]
    %v751 = vld [vmem:[#allocation5 + $0x478] sm:$0xff]
    %v752 = vld [vmem:[#allocation5 + $0x4c8] sm:$0xff]
    %v769 = vunpack.c.l.b16 %v737
    %v770 = vunpack.c.h.b16 %v737
    %v771 = vunpack.c.l.b16 %v738
    %v772 = vunpack.c.h.b16 %v738
    %v773 = vunpack.c.l.b16 %v739
    %v774 = vunpack.c.h.b16 %v739
    %v775 = vunpack.c.l.b16 %v740
    %v776 = vunpack.c.h.b16 %v740
    %v777 = vunpack.c.l.b16 %v741
    %v778 = vunpack.c.h.b16 %v741
    %v779 = vunpack.c.l.b16 %v742
    %v780 = vunpack.c.h.b16 %v742
    %v781 = vunpack.c.l.b16 %v743
    %v782 = vunpack.c.h.b16 %v743
    %v783 = vunpack.c.l.b16 %v744
    %v784 = vunpack.c.h.b16 %v744
    %v785 = vunpack.c.l.b16 %v745
    %v786 = vunpack.c.h.b16 %v745
    %v787 = vunpack.c.l.b16 %v746
    %v788 = vunpack.c.h.b16 %v746
    %v789 = vunpack.c.l.b16 %v747
    %v790 = vunpack.c.h.b16 %v747
    %v791 = vunpack.c.l.b16 %v748
    %v792 = vunpack.c.h.b16 %v748
    %v793 = vunpack.c.l.b16 %v749
    %v794 = vunpack.c.h.b16 %v749
    %v795 = vunpack.c.l.b16 %v750
    %v796 = vunpack.c.h.b16 %v750
    %v797 = vunpack.c.l.b16 %v751
    %v798 = vunpack.c.h.b16 %v751
    %v799 = vunpack.c.l.b16 %v752
    %v800 = vunpack.c.h.b16 %v752
    %v801 = vpack.c.b16 %v771, %v769
    %v802 = vpack.c.b16 %v772, %v770
    %v803 = vpack.c.b16 %v775, %v773
    %v804 = vpack.c.b16 %v776, %v774
    %v805 = vpack.c.b16 %v779, %v777
    %v806 = vpack.c.b16 %v780, %v778
    %v807 = vpack.c.b16 %v783, %v781
    %v808 = vpack.c.b16 %v784, %v782
    %v809 = vpack.c.b16 %v787, %v785
    %v810 = vpack.c.b16 %v788, %v786
    %v811 = vpack.c.b16 %v791, %v789
    %v812 = vpack.c.b16 %v792, %v790
    %v813 = vpack.c.b16 %v795, %v793
    %v814 = vpack.c.b16 %v796, %v794
    %v815 = vpack.c.b16 %v799, %v797
    %v816 = vpack.c.b16 %v800, %v798
    %833 = vmatpush.bf16.msra.mxu0 %v815
    %834 = vmatpush.bf16.msra.mxu0 %v813
    %835 = vmatpush.bf16.msra.mxu0 %v811
    %836 = vmatpush.bf16.msra.mxu0 %v809
    %837 = vmatpush.bf16.msra.mxu0 %v807
    %838 = vmatpush.bf16.msra.mxu0 %v805
    %839 = vmatpush.bf16.msra.mxu0 %v803
    %840 = vmatpush.bf16.msra.mxu0 %v801
    %841 = vmatmul.bf16.gmra.mxu0 %v84
    %v842 = vpop.f32.mrf.mxu0
    %v843 = vadd.f32 0.0, %v842
    %v844 = vpop.f32.mrf.mxu0
    %845 = vdwg.mxu0
    %846 = vmatpush.bf16.msra.mxu0 %v816
    %847 = vmatpush.bf16.msra.mxu0 %v814
    %848 = vmatpush.bf16.msra.mxu0 %v812
    %849 = vmatpush.bf16.msra.mxu0 %v810
    %850 = vmatpush.bf16.msra.mxu0 %v808
    %851 = vmatpush.bf16.msra.mxu0 %v806
    %852 = vmatpush.bf16.msra.mxu0 %v804
    %853 = vmatpush.bf16.msra.mxu0 %v802
    %854 = vmatmul.bf16.gmra.mxu0 %v84
    %v855 = vpop.f32.mrf.mxu0
    %v856 = vadd.f32 0.0, %v855
    %v857 = vpop.f32.mrf.mxu0
    %858 = vdwg.mxu0
    %v859 = vld [vmem:[#allocation7 + $0x3] sm:$0x1]
    %v861 = vperm.slane %v859, 0
    %v863 = vadd.f32 %v843, %v861
    %864 = vmax.xlane.f32.xlu0 %v863
    %v865 = vpop.xlane.xlu0 %864
    %v866 = vsub.f32 %v863, %v865
    %v867 = vmul.f32 %v866, 1.442695
    %v868 = vpow.pop %v867
    %869 = vadd.xlane.f32.xlu0 %v868
    %v870 = vpop.xlane.xlu0 %869
    %v871 = vrcp.pop %v870
    %v872 = vmul.f32 %v868, %v871
    %v873 = vpack.c.bf16 %v872, %v872
    %874 = vst [vmem:[#allocation11 + $0xc] sm:$0xf] %v873
    %v875 = vmul.f32 %v872, %v856
    %v876 = vpack.c.bf16 %v875, %v875
    %v877 = vld [vmem:[#allocation8 + $0xc0] sm:$0xf]
    %v878 = vld [vmem:[#allocation8 + $0xc4] sm:$0xf]
    %v879 = vld [vmem:[#allocation8 + $0xc8] sm:$0xf]
    %v880 = vld [vmem:[#allocation8 + $0xcc] sm:$0xf]
    %v881 = vld [vmem:[#allocation8 + $0xd0] sm:$0xf]
    %v882 = vld [vmem:[#allocation8 + $0xd4] sm:$0xf]
    %v883 = vld [vmem:[#allocation8 + $0xd8] sm:$0xf]
    %v884 = vld [vmem:[#allocation8 + $0xdc] sm:$0xf]
    %v885 = vld [vmem:[#allocation8 + $0xe0] sm:$0xf]
    %v886 = vld [vmem:[#allocation8 + $0xe4] sm:$0xf]
    %v887 = vld [vmem:[#allocation8 + $0xe8] sm:$0xf]
    %v888 = vld [vmem:[#allocation8 + $0xec] sm:$0xf]
    %v889 = vld [vmem:[#allocation8 + $0xf0] sm:$0xf]
    %v890 = vld [vmem:[#allocation8 + $0xf4] sm:$0xf]
    %v891 = vld [vmem:[#allocation8 + $0xf8] sm:$0xf]
    %v892 = vld [vmem:[#allocation8 + $0xfc] sm:$0xf]
    %v909 = vunpack.c.l.b16 %v877
    %v910 = vunpack.c.l.b16 %v878
    %v911 = vunpack.c.l.b16 %v879
    %v912 = vunpack.c.l.b16 %v880
    %v913 = vunpack.c.l.b16 %v881
    %v914 = vunpack.c.l.b16 %v882
    %v915 = vunpack.c.l.b16 %v883
    %v916 = vunpack.c.l.b16 %v884
    %v917 = vunpack.c.l.b16 %v885
    %v918 = vunpack.c.l.b16 %v886
    %v919 = vunpack.c.l.b16 %v887
    %v920 = vunpack.c.l.b16 %v888
    %v921 = vunpack.c.l.b16 %v889
    %v922 = vunpack.c.l.b16 %v890
    %v923 = vunpack.c.l.b16 %v891
    %v924 = vunpack.c.l.b16 %v892
    %v925 = vpack.c.b16 %v910, %v909
    %v926 = vpack.c.b16 %v912, %v911
    %v927 = vpack.c.b16 %v914, %v913
    %v928 = vpack.c.b16 %v916, %v915
    %v929 = vpack.c.b16 %v918, %v917
    %v930 = vpack.c.b16 %v920, %v919
    %v931 = vpack.c.b16 %v922, %v921
    %v932 = vpack.c.b16 %v924, %v923
    %941 = vmatpush.bf16.msra.mxu0 %v932
    %942 = vmatpush.bf16.msra.mxu0 %v931
    %943 = vmatpush.bf16.msra.mxu0 %v930
    %944 = vmatpush.bf16.msra.mxu0 %v929
    %945 = vmatpush.bf16.msra.mxu0 %v928
    %946 = vmatpush.bf16.msra.mxu0 %v927
    %947 = vmatpush.bf16.msra.mxu0 %v926
    %948 = vmatpush.bf16.msra.mxu0 %v925
    %949 = vmatmul.bf16.gmra.mxu0 %v876
    %v950 = vpop.f32.mrf.mxu0
    %v951 = vadd.f32 0.0, %v950
    %v952 = vpop.f32.mrf.mxu0
    %953 = vdwg.mxu0
    %v954 = vadd.f32 %v736, %v951
    %v955 = vld [vmem:[#allocation5 + $0x20] sm:$0xff]
    %v956 = vld [vmem:[#allocation5 + $0x70] sm:$0xff]
    %v957 = vld [vmem:[#allocation5 + $0xc0] sm:$0xff]
    %v958 = vld [vmem:[#allocation5 + $0x110] sm:$0xff]
    %v959 = vld [vmem:[#allocation5 + $0x160] sm:$0xff]
    %v960 = vld [vmem:[#allocation5 + $0x1b0] sm:$0xff]
    %v961 = vld [vmem:[#allocation5 + $0x200] sm:$0xff]
    %v962 = vld [vmem:[#allocation5 + $0x250] sm:$0xff]
    %v963 = vld [vmem:[#allocation5 + $0x2a0] sm:$0xff]
    %v964 = vld [vmem:[#allocation5 + $0x2f0] sm:$0xff]
    %v965 = vld [vmem:[#allocation5 + $0x340] sm:$0xff]
    %v966 = vld [vmem:[#allocation5 + $0x390] sm:$0xff]
    %v967 = vld [vmem:[#allocation5 + $0x3e0] sm:$0xff]
    %v968 = vld [vmem:[#allocation5 + $0x430] sm:$0xff]
    %v969 = vld [vmem:[#allocation5 + $0x480] sm:$0xff]
    %v970 = vld [vmem:[#allocation5 + $0x4d0] sm:$0xff]
    %v987 = vunpack.c.l.b16 %v955
    %v988 = vunpack.c.h.b16 %v955
    %v989 = vunpack.c.l.b16 %v956
    %v990 = vunpack.c.h.b16 %v956
    %v991 = vunpack.c.l.b16 %v957
    %v992 = vunpack.c.h.b16 %v957
    %v993 = vunpack.c.l.b16 %v958
    %v994 = vunpack.c.h.b16 %v958
    %v995 = vunpack.c.l.b16 %v959
    %v996 = vunpack.c.h.b16 %v959
    %v997 = vunpack.c.l.b16 %v960
    %v998 = vunpack.c.h.b16 %v960
    %v999 = vunpack.c.l.b16 %v961
    %v1000 = vunpack.c.h.b16 %v961
    %v1001 = vunpack.c.l.b16 %v962
    %v1002 = vunpack.c.h.b16 %v962
    %v1003 = vunpack.c.l.b16 %v963
    %v1004 = vunpack.c.h.b16 %v963
    %v1005 = vunpack.c.l.b16 %v964
    %v1006 = vunpack.c.h.b16 %v964
    %v1007 = vunpack.c.l.b16 %v965
    %v1008 = vunpack.c.h.b16 %v965
    %v1009 = vunpack.c.l.b16 %v966
    %v1010 = vunpack.c.h.b16 %v966
    %v1011 = vunpack.c.l.b16 %v967
    %v1012 = vunpack.c.h.b16 %v967
    %v1013 = vunpack.c.l.b16 %v968
    %v1014 = vunpack.c.h.b16 %v968
    %v1015 = vunpack.c.l.b16 %v969
    %v1016 = vunpack.c.h.b16 %v969
    %v1017 = vunpack.c.l.b16 %v970
    %v1018 = vunpack.c.h.b16 %v970
    %v1019 = vpack.c.b16 %v989, %v987
    %v1020 = vpack.c.b16 %v990, %v988
    %v1021 = vpack.c.b16 %v993, %v991
    %v1022 = vpack.c.b16 %v994, %v992
    %v1023 = vpack.c.b16 %v997, %v995
    %v1024 = vpack.c.b16 %v998, %v996
    %v1025 = vpack.c.b16 %v1001, %v999
    %v1026 = vpack.c.b16 %v1002, %v1000
    %v1027 = vpack.c.b16 %v1005, %v1003
    %v1028 = vpack.c.b16 %v1006, %v1004
    %v1029 = vpack.c.b16 %v1009, %v1007
    %v1030 = vpack.c.b16 %v1010, %v1008
    %v1031 = vpack.c.b16 %v1013, %v1011
    %v1032 = vpack.c.b16 %v1014, %v1012
    %v1033 = vpack.c.b16 %v1017, %v1015
    %v1034 = vpack.c.b16 %v1018, %v1016
    %1051 = vmatpush.bf16.msra.mxu0 %v1033
    %1052 = vmatpush.bf16.msra.mxu0 %v1031
    %1053 = vmatpush.bf16.msra.mxu0 %v1029
    %1054 = vmatpush.bf16.msra.mxu0 %v1027
    %1055 = vmatpush.bf16.msra.mxu0 %v1025
    %1056 = vmatpush.bf16.msra.mxu0 %v1023
    %1057 = vmatpush.bf16.msra.mxu0 %v1021
    %1058 = vmatpush.bf16.msra.mxu0 %v1019
    %1059 = vmatmul.bf16.gmra.mxu0 %v84
    %v1060 = vpop.f32.mrf.mxu0
    %v1061 = vadd.f32 0.0, %v1060
    %v1062 = vpop.f32.mrf.mxu0
    %1063 = vdwg.mxu0
    %1064 = vmatpush.bf16.msra.mxu0 %v1034
    %1065 = vmatpush.bf16.msra.mxu0 %v1032
    %1066 = vmatpush.bf16.msra.mxu0 %v1030
    %1067 = vmatpush.bf16.msra.mxu0 %v1028
    %1068 = vmatpush.bf16.msra.mxu0 %v1026
    %1069 = vmatpush.bf16.msra.mxu0 %v1024
    %1070 = vmatpush.bf16.msra.mxu0 %v1022
    %1071 = vmatpush.bf16.msra.mxu0 %v1020
    %1072 = vmatmul.bf16.gmra.mxu0 %v84
    %v1073 = vpop.f32.mrf.mxu0
    %v1074 = vadd.f32 0.0, %v1073
    %v1075 = vpop.f32.mrf.mxu0
    %1076 = vdwg.mxu0
    %v1077 = vld [vmem:[#allocation7 + $0x4] sm:$0x1]
    %v1079 = vperm.slane %v1077, 0
    %v1081 = vadd.f32 %v1061, %v1079
    %1082 = vmax.xlane.f32.xlu0 %v1081
    %v1083 = vpop.xlane.xlu0 %1082
    %v1084 = vsub.f32 %v1081, %v1083
    %v1085 = vmul.f32 %v1084, 1.442695
    %v1086 = vpow.pop %v1085
    %1087 = vadd.xlane.f32.xlu0 %v1086
    %v1088 = vpop.xlane.xlu0 %1087
    %v1089 = vrcp.pop %v1088
    %v1090 = vmul.f32 %v1086, %v1089
    %v1091 = vpack.c.bf16 %v1090, %v1090
    %1092 = vst [vmem:[#allocation11 + $0x10] sm:$0xf] %v1091
    %v1093 = vmul.f32 %v1090, %v1074
    %v1094 = vpack.c.bf16 %v1093, %v1093
    %v1095 = vld [vmem:[#allocation8 + $0x100] sm:$0xf]
    %v1096 = vld [vmem:[#allocation8 + $0x104] sm:$0xf]
    %v1097 = vld [vmem:[#allocation8 + $0x108] sm:$0xf]
    %v1098 = vld [vmem:[#allocation8 + $0x10c] sm:$0xf]
    %v1099 = vld [vmem:[#allocation8 + $0x110] sm:$0xf]
    %v1100 = vld [vmem:[#allocation8 + $0x114] sm:$0xf]
    %v1101 = vld [vmem:[#allocation8 + $0x118] sm:$0xf]
    %v1102 = vld [vmem:[#allocation8 + $0x11c] sm:$0xf]
    %v1103 = vld [vmem:[#allocation8 + $0x120] sm:$0xf]
    %v1104 = vld [vmem:[#allocation8 + $0x124] sm:$0xf]
    %v1105 = vld [vmem:[#allocation8 + $0x128] sm:$0xf]
    %v1106 = vld [vmem:[#allocation8 + $0x12c] sm:$0xf]
    %v1107 = vld [vmem:[#allocation8 + $0x130] sm:$0xf]
    %v1108 = vld [vmem:[#allocation8 + $0x134] sm:$0xf]
    %v1109 = vld [vmem:[#allocation8 + $0x138] sm:$0xf]
    %v1110 = vld [vmem:[#allocation8 + $0x13c] sm:$0xf]
    %v1127 = vunpack.c.l.b16 %v1095
    %v1128 = vunpack.c.l.b16 %v1096
    %v1129 = vunpack.c.l.b16 %v1097
    %v1130 = vunpack.c.l.b16 %v1098
    %v1131 = vunpack.c.l.b16 %v1099
    %v1132 = vunpack.c.l.b16 %v1100
    %v1133 = vunpack.c.l.b16 %v1101
    %v1134 = vunpack.c.l.b16 %v1102
    %v1135 = vunpack.c.l.b16 %v1103
    %v1136 = vunpack.c.l.b16 %v1104
    %v1137 = vunpack.c.l.b16 %v1105
    %v1138 = vunpack.c.l.b16 %v1106
    %v1139 = vunpack.c.l.b16 %v1107
    %v1140 = vunpack.c.l.b16 %v1108
    %v1141 = vunpack.c.l.b16 %v1109
    %v1142 = vunpack.c.l.b16 %v1110
    %v1143 = vpack.c.b16 %v1128, %v1127
    %v1144 = vpack.c.b16 %v1130, %v1129
    %v1145 = vpack.c.b16 %v1132, %v1131
    %v1146 = vpack.c.b16 %v1134, %v1133
    %v1147 = vpack.c.b16 %v1136, %v1135
    %v1148 = vpack.c.b16 %v1138, %v1137
    %v1149 = vpack.c.b16 %v1140, %v1139
    %v1150 = vpack.c.b16 %v1142, %v1141
    %1159 = vmatpush.bf16.msra.mxu0 %v1150
    %1160 = vmatpush.bf16.msra.mxu0 %v1149
    %1161 = vmatpush.bf16.msra.mxu0 %v1148
    %1162 = vmatpush.bf16.msra.mxu0 %v1147
    %1163 = vmatpush.bf16.msra.mxu0 %v1146
    %1164 = vmatpush.bf16.msra.mxu0 %v1145
    %1165 = vmatpush.bf16.msra.mxu0 %v1144
    %1166 = vmatpush.bf16.msra.mxu0 %v1143
    %1167 = vmatmul.bf16.gmra.mxu0 %v1094
    %v1168 = vpop.f32.mrf.mxu0
    %v1169 = vadd.f32 0.0, %v1168
    %v1170 = vpop.f32.mrf.mxu0
    %1171 = vdwg.mxu0
    %v1172 = vadd.f32 %v954, %v1169
    %v1173 = vld [vmem:[#allocation5 + $0x28] sm:$0xff]
    %v1174 = vld [vmem:[#allocation5 + $0x78] sm:$0xff]
    %v1175 = vld [vmem:[#allocation5 + $0xc8] sm:$0xff]
    %v1176 = vld [vmem:[#allocation5 + $0x118] sm:$0xff]
    %v1177 = vld [vmem:[#allocation5 + $0x168] sm:$0xff]
    %v1178 = vld [vmem:[#allocation5 + $0x1b8] sm:$0xff]
    %v1179 = vld [vmem:[#allocation5 + $0x208] sm:$0xff]
    %v1180 = vld [vmem:[#allocation5 + $0x258] sm:$0xff]
    %v1181 = vld [vmem:[#allocation5 + $0x2a8] sm:$0xff]
    %v1182 = vld [vmem:[#allocation5 + $0x2f8] sm:$0xff]
    %v1183 = vld [vmem:[#allocation5 + $0x348] sm:$0xff]
    %v1184 = vld [vmem:[#allocation5 + $0x398] sm:$0xff]
    %v1185 = vld [vmem:[#allocation5 + $0x3e8] sm:$0xff]
    %v1186 = vld [vmem:[#allocation5 + $0x438] sm:$0xff]
    %v1187 = vld [vmem:[#allocation5 + $0x488] sm:$0xff]
    %v1188 = vld [vmem:[#allocation5 + $0x4d8] sm:$0xff]
    %v1205 = vunpack.c.l.b16 %v1173
    %v1206 = vunpack.c.h.b16 %v1173
    %v1207 = vunpack.c.l.b16 %v1174
    %v1208 = vunpack.c.h.b16 %v1174
    %v1209 = vunpack.c.l.b16 %v1175
    %v1210 = vunpack.c.h.b16 %v1175
    %v1211 = vunpack.c.l.b16 %v1176
    %v1212 = vunpack.c.h.b16 %v1176
    %v1213 = vunpack.c.l.b16 %v1177
    %v1214 = vunpack.c.h.b16 %v1177
    %v1215 = vunpack.c.l.b16 %v1178
    %v1216 = vunpack.c.h.b16 %v1178
    %v1217 = vunpack.c.l.b16 %v1179
    %v1218 = vunpack.c.h.b16 %v1179
    %v1219 = vunpack.c.l.b16 %v1180
    %v1220 = vunpack.c.h.b16 %v1180
    %v1221 = vunpack.c.l.b16 %v1181
    %v1222 = vunpack.c.h.b16 %v1181
    %v1223 = vunpack.c.l.b16 %v1182
    %v1224 = vunpack.c.h.b16 %v1182
    %v1225 = vunpack.c.l.b16 %v1183
    %v1226 = vunpack.c.h.b16 %v1183
    %v1227 = vunpack.c.l.b16 %v1184
    %v1228 = vunpack.c.h.b16 %v1184
    %v1229 = vunpack.c.l.b16 %v1185
    %v1230 = vunpack.c.h.b16 %v1185
    %v1231 = vunpack.c.l.b16 %v1186
    %v1232 = vunpack.c.h.b16 %v1186
    %v1233 = vunpack.c.l.b16 %v1187
    %v1234 = vunpack.c.h.b16 %v1187
    %v1235 = vunpack.c.l.b16 %v1188
    %v1236 = vunpack.c.h.b16 %v1188
    %v1237 = vpack.c.b16 %v1207, %v1205
    %v1238 = vpack.c.b16 %v1208, %v1206
    %v1239 = vpack.c.b16 %v1211, %v1209
    %v1240 = vpack.c.b16 %v1212, %v1210
    %v1241 = vpack.c.b16 %v1215, %v1213
    %v1242 = vpack.c.b16 %v1216, %v1214
    %v1243 = vpack.c.b16 %v1219, %v1217
    %v1244 = vpack.c.b16 %v1220, %v1218
    %v1245 = vpack.c.b16 %v1223, %v1221
    %v1246 = vpack.c.b16 %v1224, %v1222
    %v1247 = vpack.c.b16 %v1227, %v1225
    %v1248 = vpack.c.b16 %v1228, %v1226
    %v1249 = vpack.c.b16 %v1231, %v1229
    %v1250 = vpack.c.b16 %v1232, %v1230
    %v1251 = vpack.c.b16 %v1235, %v1233
    %v1252 = vpack.c.b16 %v1236, %v1234
    %1269 = vmatpush.bf16.msra.mxu0 %v1251
    %1270 = vmatpush.bf16.msra.mxu0 %v1249
    %1271 = vmatpush.bf16.msra.mxu0 %v1247
    %1272 = vmatpush.bf16.msra.mxu0 %v1245
    %1273 = vmatpush.bf16.msra.mxu0 %v1243
    %1274 = vmatpush.bf16.msra.mxu0 %v1241
    %1275 = vmatpush.bf16.msra.mxu0 %v1239
    %1276 = vmatpush.bf16.msra.mxu0 %v1237
    %1277 = vmatmul.bf16.gmra.mxu0 %v84
    %v1278 = vpop.f32.mrf.mxu0
    %v1279 = vadd.f32 0.0, %v1278
    %v1280 = vpop.f32.mrf.mxu0
    %1281 = vdwg.mxu0
    %1282 = vmatpush.bf16.msra.mxu0 %v1252
    %1283 = vmatpush.bf16.msra.mxu0 %v1250
    %1284 = vmatpush.bf16.msra.mxu0 %v1248
    %1285 = vmatpush.bf16.msra.mxu0 %v1246
    %1286 = vmatpush.bf16.msra.mxu0 %v1244
    %1287 = vmatpush.bf16.msra.mxu0 %v1242
    %1288 = vmatpush.bf16.msra.mxu0 %v1240
    %1289 = vmatpush.bf16.msra.mxu0 %v1238
    %1290 = vmatmul.bf16.gmra.mxu0 %v84
    %v1291 = vpop.f32.mrf.mxu0
    %v1292 = vadd.f32 0.0, %v1291
    %v1293 = vpop.f32.mrf.mxu0
    %1294 = vdwg.mxu0
    %v1295 = vld [vmem:[#allocation7 + $0x5] sm:$0x1]
    %v1297 = vperm.slane %v1295, 0
    %v1299 = vadd.f32 %v1279, %v1297
    %1300 = vmax.xlane.f32.xlu0 %v1299
    %v1301 = vpop.xlane.xlu0 %1300
    %v1302 = vsub.f32 %v1299, %v1301
    %v1303 = vmul.f32 %v1302, 1.442695
    %v1304 = vpow.pop %v1303
    %1305 = vadd.xlane.f32.xlu0 %v1304
    %v1306 = vpop.xlane.xlu0 %1305
    %v1307 = vrcp.pop %v1306
    %v1308 = vmul.f32 %v1304, %v1307
    %v1309 = vpack.c.bf16 %v1308, %v1308
    %1310 = vst [vmem:[#allocation11 + $0x14] sm:$0xf] %v1309
    %v1311 = vmul.f32 %v1308, %v1292
    %v1312 = vpack.c.bf16 %v1311, %v1311
    %v1313 = vld [vmem:[#allocation8 + $0x140] sm:$0xf]
    %v1314 = vld [vmem:[#allocation8 + $0x144] sm:$0xf]
    %v1315 = vld [vmem:[#allocation8 + $0x148] sm:$0xf]
    %v1316 = vld [vmem:[#allocation8 + $0x14c] sm:$0xf]
    %v1317 = vld [vmem:[#allocation8 + $0x150] sm:$0xf]
    %v1318 = vld [vmem:[#allocation8 + $0x154] sm:$0xf]
    %v1319 = vld [vmem:[#allocation8 + $0x158] sm:$0xf]
    %v1320 = vld [vmem:[#allocation8 + $0x15c] sm:$0xf]
    %v1321 = vld [vmem:[#allocation8 + $0x160] sm:$0xf]
    %v1322 = vld [vmem:[#allocation8 + $0x164] sm:$0xf]
    %v1323 = vld [vmem:[#allocation8 + $0x168] sm:$0xf]
    %v1324 = vld [vmem:[#allocation8 + $0x16c] sm:$0xf]
    %v1325 = vld [vmem:[#allocation8 + $0x170] sm:$0xf]
    %v1326 = vld [vmem:[#allocation8 + $0x174] sm:$0xf]
    %v1327 = vld [vmem:[#allocation8 + $0x178] sm:$0xf]
    %v1328 = vld [vmem:[#allocation8 + $0x17c] sm:$0xf]
    %v1345 = vunpack.c.l.b16 %v1313
    %v1346 = vunpack.c.l.b16 %v1314
    %v1347 = vunpack.c.l.b16 %v1315
    %v1348 = vunpack.c.l.b16 %v1316
    %v1349 = vunpack.c.l.b16 %v1317
    %v1350 = vunpack.c.l.b16 %v1318
    %v1351 = vunpack.c.l.b16 %v1319
    %v1352 = vunpack.c.l.b16 %v1320
    %v1353 = vunpack.c.l.b16 %v1321
    %v1354 = vunpack.c.l.b16 %v1322
    %v1355 = vunpack.c.l.b16 %v1323
    %v1356 = vunpack.c.l.b16 %v1324
    %v1357 = vunpack.c.l.b16 %v1325
    %v1358 = vunpack.c.l.b16 %v1326
    %v1359 = vunpack.c.l.b16 %v1327
    %v1360 = vunpack.c.l.b16 %v1328
    %v1361 = vpack.c.b16 %v1346, %v1345
    %v1362 = vpack.c.b16 %v1348, %v1347
    %v1363 = vpack.c.b16 %v1350, %v1349
    %v1364 = vpack.c.b16 %v1352, %v1351
    %v1365 = vpack.c.b16 %v1354, %v1353
    %v1366 = vpack.c.b16 %v1356, %v1355
    %v1367 = vpack.c.b16 %v1358, %v1357
    %v1368 = vpack.c.b16 %v1360, %v1359
    %1377 = vmatpush.bf16.msra.mxu0 %v1368
    %1378 = vmatpush.bf16.msra.mxu0 %v1367
    %1379 = vmatpush.bf16.msra.mxu0 %v1366
    %1380 = vmatpush.bf16.msra.mxu0 %v1365
    %1381 = vmatpush.bf16.msra.mxu0 %v1364
    %1382 = vmatpush.bf16.msra.mxu0 %v1363
    %1383 = vmatpush.bf16.msra.mxu0 %v1362
    %1384 = vmatpush.bf16.msra.mxu0 %v1361
    %1385 = vmatmul.bf16.gmra.mxu0 %v1312
    %v1386 = vpop.f32.mrf.mxu0
    %v1387 = vadd.f32 0.0, %v1386
    %v1388 = vpop.f32.mrf.mxu0
    %1389 = vdwg.mxu0
    %v1390 = vadd.f32 %v1172, %v1387
    %v1391 = vld [vmem:[#allocation5 + $0x30] sm:$0xff]
    %v1392 = vld [vmem:[#allocation5 + $0x80] sm:$0xff]
    %v1393 = vld [vmem:[#allocation5 + $0xd0] sm:$0xff]
    %v1394 = vld [vmem:[#allocation5 + $0x120] sm:$0xff]
    %v1395 = vld [vmem:[#allocation5 + $0x170] sm:$0xff]
    %v1396 = vld [vmem:[#allocation5 + $0x1c0] sm:$0xff]
    %v1397 = vld [vmem:[#allocation5 + $0x210] sm:$0xff]
    %v1398 = vld [vmem:[#allocation5 + $0x260] sm:$0xff]
    %v1399 = vld [vmem:[#allocation5 + $0x2b0] sm:$0xff]
    %v1400 = vld [vmem:[#allocation5 + $0x300] sm:$0xff]
    %v1401 = vld [vmem:[#allocation5 + $0x350] sm:$0xff]
    %v1402 = vld [vmem:[#allocation5 + $0x3a0] sm:$0xff]
    %v1403 = vld [vmem:[#allocation5 + $0x3f0] sm:$0xff]
    %v1404 = vld [vmem:[#allocation5 + $0x440] sm:$0xff]
    %v1405 = vld [vmem:[#allocation5 + $0x490] sm:$0xff]
    %v1406 = vld [vmem:[#allocation5 + $0x4e0] sm:$0xff]
    %v1423 = vunpack.c.l.b16 %v1391
    %v1424 = vunpack.c.h.b16 %v1391
    %v1425 = vunpack.c.l.b16 %v1392
    %v1426 = vunpack.c.h.b16 %v1392
    %v1427 = vunpack.c.l.b16 %v1393
    %v1428 = vunpack.c.h.b16 %v1393
    %v1429 = vunpack.c.l.b16 %v1394
    %v1430 = vunpack.c.h.b16 %v1394
    %v1431 = vunpack.c.l.b16 %v1395
    %v1432 = vunpack.c.h.b16 %v1395
    %v1433 = vunpack.c.l.b16 %v1396
    %v1434 = vunpack.c.h.b16 %v1396
    %v1435 = vunpack.c.l.b16 %v1397
    %v1436 = vunpack.c.h.b16 %v1397
    %v1437 = vunpack.c.l.b16 %v1398
    %v1438 = vunpack.c.h.b16 %v1398
    %v1439 = vunpack.c.l.b16 %v1399
    %v1440 = vunpack.c.h.b16 %v1399
    %v1441 = vunpack.c.l.b16 %v1400
    %v1442 = vunpack.c.h.b16 %v1400
    %v1443 = vunpack.c.l.b16 %v1401
    %v1444 = vunpack.c.h.b16 %v1401
    %v1445 = vunpack.c.l.b16 %v1402
    %v1446 = vunpack.c.h.b16 %v1402
    %v1447 = vunpack.c.l.b16 %v1403
    %v1448 = vunpack.c.h.b16 %v1403
    %v1449 = vunpack.c.l.b16 %v1404
    %v1450 = vunpack.c.h.b16 %v1404
    %v1451 = vunpack.c.l.b16 %v1405
    %v1452 = vunpack.c.h.b16 %v1405
    %v1453 = vunpack.c.l.b16 %v1406
    %v1454 = vunpack.c.h.b16 %v1406
    %v1455 = vpack.c.b16 %v1425, %v1423
    %v1456 = vpack.c.b16 %v1426, %v1424
    %v1457 = vpack.c.b16 %v1429, %v1427
    %v1458 = vpack.c.b16 %v1430, %v1428
    %v1459 = vpack.c.b16 %v1433, %v1431
    %v1460 = vpack.c.b16 %v1434, %v1432
    %v1461 = vpack.c.b16 %v1437, %v1435
    %v1462 = vpack.c.b16 %v1438, %v1436
    %v1463 = vpack.c.b16 %v1441, %v1439
    %v1464 = vpack.c.b16 %v1442, %v1440
    %v1465 = vpack.c.b16 %v1445, %v1443
    %v1466 = vpack.c.b16 %v1446, %v1444
    %v1467 = vpack.c.b16 %v1449, %v1447
    %v1468 = vpack.c.b16 %v1450, %v1448
    %v1469 = vpack.c.b16 %v1453, %v1451
    %v1470 = vpack.c.b16 %v1454, %v1452
    %1487 = vmatpush.bf16.msra.mxu0 %v1469
    %1488 = vmatpush.bf16.msra.mxu0 %v1467
    %1489 = vmatpush.bf16.msra.mxu0 %v1465
    %1490 = vmatpush.bf16.msra.mxu0 %v1463
    %1491 = vmatpush.bf16.msra.mxu0 %v1461
    %1492 = vmatpush.bf16.msra.mxu0 %v1459
    %1493 = vmatpush.bf16.msra.mxu0 %v1457
    %1494 = vmatpush.bf16.msra.mxu0 %v1455
    %1495 = vmatmul.bf16.gmra.mxu0 %v84
    %v1496 = vpop.f32.mrf.mxu0
    %v1497 = vadd.f32 0.0, %v1496
    %v1498 = vpop.f32.mrf.mxu0
    %1499 = vdwg.mxu0
    %1500 = vmatpush.bf16.msra.mxu0 %v1470
    %1501 = vmatpush.bf16.msra.mxu0 %v1468
    %1502 = vmatpush.bf16.msra.mxu0 %v1466
    %1503 = vmatpush.bf16.msra.mxu0 %v1464
    %1504 = vmatpush.bf16.msra.mxu0 %v1462
    %1505 = vmatpush.bf16.msra.mxu0 %v1460
    %1506 = vmatpush.bf16.msra.mxu0 %v1458
    %1507 = vmatpush.bf16.msra.mxu0 %v1456
    %1508 = vmatmul.bf16.gmra.mxu0 %v84
    %v1509 = vpop.f32.mrf.mxu0
    %v1510 = vadd.f32 0.0, %v1509
    %v1511 = vpop.f32.mrf.mxu0
    %1512 = vdwg.mxu0
    %v1513 = vld [vmem:[#allocation7 + $0x6] sm:$0x1]
    %v1515 = vperm.slane %v1513, 0
    %v1517 = vadd.f32 %v1497, %v1515
    %1518 = vmax.xlane.f32.xlu0 %v1517
    %v1519 = vpop.xlane.xlu0 %1518
    %v1520 = vsub.f32 %v1517, %v1519
    %v1521 = vmul.f32 %v1520, 1.442695
    %v1522 = vpow.pop %v1521
    %1523 = vadd.xlane.f32.xlu0 %v1522
    %v1524 = vpop.xlane.xlu0 %1523
    %v1525 = vrcp.pop %v1524
    %v1526 = vmul.f32 %v1522, %v1525
    %v1527 = vpack.c.bf16 %v1526, %v1526
    %1528 = vst [vmem:[#allocation11 + $0x18] sm:$0xf] %v1527
    %v1529 = vmul.f32 %v1526, %v1510
    %v1530 = vpack.c.bf16 %v1529, %v1529
    %v1531 = vld [vmem:[#allocation8 + $0x180] sm:$0xf]
    %v1532 = vld [vmem:[#allocation8 + $0x184] sm:$0xf]
    %v1533 = vld [vmem:[#allocation8 + $0x188] sm:$0xf]
    %v1534 = vld [vmem:[#allocation8 + $0x18c] sm:$0xf]
    %v1535 = vld [vmem:[#allocation8 + $0x190] sm:$0xf]
    %v1536 = vld [vmem:[#allocation8 + $0x194] sm:$0xf]
    %v1537 = vld [vmem:[#allocation8 + $0x198] sm:$0xf]
    %v1538 = vld [vmem:[#allocation8 + $0x19c] sm:$0xf]
    %v1539 = vld [vmem:[#allocation8 + $0x1a0] sm:$0xf]
    %v1540 = vld [vmem:[#allocation8 + $0x1a4] sm:$0xf]
    %v1541 = vld [vmem:[#allocation8 + $0x1a8] sm:$0xf]
    %v1542 = vld [vmem:[#allocation8 + $0x1ac] sm:$0xf]
    %v1543 = vld [vmem:[#allocation8 + $0x1b0] sm:$0xf]
    %v1544 = vld [vmem:[#allocation8 + $0x1b4] sm:$0xf]
    %v1545 = vld [vmem:[#allocation8 + $0x1b8] sm:$0xf]
    %v1546 = vld [vmem:[#allocation8 + $0x1bc] sm:$0xf]
    %v1563 = vunpack.c.l.b16 %v1531
    %v1564 = vunpack.c.l.b16 %v1532
    %v1565 = vunpack.c.l.b16 %v1533
    %v1566 = vunpack.c.l.b16 %v1534
    %v1567 = vunpack.c.l.b16 %v1535
    %v1568 = vunpack.c.l.b16 %v1536
    %v1569 = vunpack.c.l.b16 %v1537
    %v1570 = vunpack.c.l.b16 %v1538
    %v1571 = vunpack.c.l.b16 %v1539
    %v1572 = vunpack.c.l.b16 %v1540
    %v1573 = vunpack.c.l.b16 %v1541
    %v1574 = vunpack.c.l.b16 %v1542
    %v1575 = vunpack.c.l.b16 %v1543
    %v1576 = vunpack.c.l.b16 %v1544
    %v1577 = vunpack.c.l.b16 %v1545
    %v1578 = vunpack.c.l.b16 %v1546
    %v1579 = vpack.c.b16 %v1564, %v1563
    %v1580 = vpack.c.b16 %v1566, %v1565
    %v1581 = vpack.c.b16 %v1568, %v1567
    %v1582 = vpack.c.b16 %v1570, %v1569
    %v1583 = vpack.c.b16 %v1572, %v1571
    %v1584 = vpack.c.b16 %v1574, %v1573
    %v1585 = vpack.c.b16 %v1576, %v1575
    %v1586 = vpack.c.b16 %v1578, %v1577
    %1595 = vmatpush.bf16.msra.mxu0 %v1586
    %1596 = vmatpush.bf16.msra.mxu0 %v1585
    %1597 = vmatpush.bf16.msra.mxu0 %v1584
    %1598 = vmatpush.bf16.msra.mxu0 %v1583
    %1599 = vmatpush.bf16.msra.mxu0 %v1582
    %1600 = vmatpush.bf16.msra.mxu0 %v1581
    %1601 = vmatpush.bf16.msra.mxu0 %v1580
    %1602 = vmatpush.bf16.msra.mxu0 %v1579
    %1603 = vmatmul.bf16.gmra.mxu0 %v1530
    %v1604 = vpop.f32.mrf.mxu0
    %v1605 = vadd.f32 0.0, %v1604
    %v1606 = vpop.f32.mrf.mxu0
    %1607 = vdwg.mxu0
    %v1608 = vadd.f32 %v1390, %v1605
    %v1609 = vld [vmem:[#allocation5 + $0x38] sm:$0xff]
    %v1610 = vld [vmem:[#allocation5 + $0x88] sm:$0xff]
    %v1611 = vld [vmem:[#allocation5 + $0xd8] sm:$0xff]
    %v1612 = vld [vmem:[#allocation5 + $0x128] sm:$0xff]
    %v1613 = vld [vmem:[#allocation5 + $0x178] sm:$0xff]
    %v1614 = vld [vmem:[#allocation5 + $0x1c8] sm:$0xff]
    %v1615 = vld [vmem:[#allocation5 + $0x218] sm:$0xff]
    %v1616 = vld [vmem:[#allocation5 + $0x268] sm:$0xff]
    %v1617 = vld [vmem:[#allocation5 + $0x2b8] sm:$0xff]
    %v1618 = vld [vmem:[#allocation5 + $0x308] sm:$0xff]
    %v1619 = vld [vmem:[#allocation5 + $0x358] sm:$0xff]
    %v1620 = vld [vmem:[#allocation5 + $0x3a8] sm:$0xff]
    %v1621 = vld [vmem:[#allocation5 + $0x3f8] sm:$0xff]
    %v1622 = vld [vmem:[#allocation5 + $0x448] sm:$0xff]
    %v1623 = vld [vmem:[#allocation5 + $0x498] sm:$0xff]
    %v1624 = vld [vmem:[#allocation5 + $0x4e8] sm:$0xff]
    %v1641 = vunpack.c.l.b16 %v1609
    %v1642 = vunpack.c.h.b16 %v1609
    %v1643 = vunpack.c.l.b16 %v1610
    %v1644 = vunpack.c.h.b16 %v1610
    %v1645 = vunpack.c.l.b16 %v1611
    %v1646 = vunpack.c.h.b16 %v1611
    %v1647 = vunpack.c.l.b16 %v1612
    %v1648 = vunpack.c.h.b16 %v1612
    %v1649 = vunpack.c.l.b16 %v1613
    %v1650 = vunpack.c.h.b16 %v1613
    %v1651 = vunpack.c.l.b16 %v1614
    %v1652 = vunpack.c.h.b16 %v1614
    %v1653 = vunpack.c.l.b16 %v1615
    %v1654 = vunpack.c.h.b16 %v1615
    %v1655 = vunpack.c.l.b16 %v1616
    %v1656 = vunpack.c.h.b16 %v1616
    %v1657 = vunpack.c.l.b16 %v1617
    %v1658 = vunpack.c.h.b16 %v1617
    %v1659 = vunpack.c.l.b16 %v1618
    %v1660 = vunpack.c.h.b16 %v1618
    %v1661 = vunpack.c.l.b16 %v1619
    %v1662 = vunpack.c.h.b16 %v1619
    %v1663 = vunpack.c.l.b16 %v1620
    %v1664 = vunpack.c.h.b16 %v1620
    %v1665 = vunpack.c.l.b16 %v1621
    %v1666 = vunpack.c.h.b16 %v1621
    %v1667 = vunpack.c.l.b16 %v1622
    %v1668 = vunpack.c.h.b16 %v1622
    %v1669 = vunpack.c.l.b16 %v1623
    %v1670 = vunpack.c.h.b16 %v1623
    %v1671 = vunpack.c.l.b16 %v1624
    %v1672 = vunpack.c.h.b16 %v1624
    %v1673 = vpack.c.b16 %v1643, %v1641
    %v1674 = vpack.c.b16 %v1644, %v1642
    %v1675 = vpack.c.b16 %v1647, %v1645
    %v1676 = vpack.c.b16 %v1648, %v1646
    %v1677 = vpack.c.b16 %v1651, %v1649
    %v1678 = vpack.c.b16 %v1652, %v1650
    %v1679 = vpack.c.b16 %v1655, %v1653
    %v1680 = vpack.c.b16 %v1656, %v1654
    %v1681 = vpack.c.b16 %v1659, %v1657
    %v1682 = vpack.c.b16 %v1660, %v1658
    %v1683 = vpack.c.b16 %v1663, %v1661
    %v1684 = vpack.c.b16 %v1664, %v1662
    %v1685 = vpack.c.b16 %v1667, %v1665
    %v1686 = vpack.c.b16 %v1668, %v1666
    %v1687 = vpack.c.b16 %v1671, %v1669
    %v1688 = vpack.c.b16 %v1672, %v1670
    %1705 = vmatpush.bf16.msra.mxu0 %v1687
    %1706 = vmatpush.bf16.msra.mxu0 %v1685
    %1707 = vmatpush.bf16.msra.mxu0 %v1683
    %1708 = vmatpush.bf16.msra.mxu0 %v1681
    %1709 = vmatpush.bf16.msra.mxu0 %v1679
    %1710 = vmatpush.bf16.msra.mxu0 %v1677
    %1711 = vmatpush.bf16.msra.mxu0 %v1675
    %1712 = vmatpush.bf16.msra.mxu0 %v1673
    %1713 = vmatmul.bf16.gmra.mxu0 %v84
    %v1714 = vpop.f32.mrf.mxu0
    %v1715 = vadd.f32 0.0, %v1714
    %v1716 = vpop.f32.mrf.mxu0
    %1717 = vdwg.mxu0
    %1718 = vmatpush.bf16.msra.mxu0 %v1688
    %1719 = vmatpush.bf16.msra.mxu0 %v1686
    %1720 = vmatpush.bf16.msra.mxu0 %v1684
    %1721 = vmatpush.bf16.msra.mxu0 %v1682
    %1722 = vmatpush.bf16.msra.mxu0 %v1680
    %1723 = vmatpush.bf16.msra.mxu0 %v1678
    %1724 = vmatpush.bf16.msra.mxu0 %v1676
    %1725 = vmatpush.bf16.msra.mxu0 %v1674
    %1726 = vmatmul.bf16.gmra.mxu0 %v84
    %v1727 = vpop.f32.mrf.mxu0
    %v1728 = vadd.f32 0.0, %v1727
    %v1729 = vpop.f32.mrf.mxu0
    %1730 = vdwg.mxu0
    %v1731 = vld [vmem:[#allocation7 + $0x7] sm:$0x1]
    %v1733 = vperm.slane %v1731, 0
    %v1735 = vadd.f32 %v1715, %v1733
    %1736 = vmax.xlane.f32.xlu0 %v1735
    %v1737 = vpop.xlane.xlu0 %1736
    %v1738 = vsub.f32 %v1735, %v1737
    %v1739 = vmul.f32 %v1738, 1.442695
    %v1740 = vpow.pop %v1739
    %1741 = vadd.xlane.f32.xlu0 %v1740
    %v1742 = vpop.xlane.xlu0 %1741
    %v1743 = vrcp.pop %v1742
    %v1744 = vmul.f32 %v1740, %v1743
    %v1745 = vpack.c.bf16 %v1744, %v1744
    %1746 = vst [vmem:[#allocation11 + $0x1c] sm:$0xf] %v1745
    %v1747 = vmul.f32 %v1744, %v1728
    %v1748 = vpack.c.bf16 %v1747, %v1747
    %v1749 = vld [vmem:[#allocation8 + $0x1c0] sm:$0xf]
    %v1750 = vld [vmem:[#allocation8 + $0x1c4] sm:$0xf]
    %v1751 = vld [vmem:[#allocation8 + $0x1c8] sm:$0xf]
    %v1752 = vld [vmem:[#allocation8 + $0x1cc] sm:$0xf]
    %v1753 = vld [vmem:[#allocation8 + $0x1d0] sm:$0xf]
    %v1754 = vld [vmem:[#allocation8 + $0x1d4] sm:$0xf]
    %v1755 = vld [vmem:[#allocation8 + $0x1d8] sm:$0xf]
    %v1756 = vld [vmem:[#allocation8 + $0x1dc] sm:$0xf]
    %v1757 = vld [vmem:[#allocation8 + $0x1e0] sm:$0xf]
    %v1758 = vld [vmem:[#allocation8 + $0x1e4] sm:$0xf]
    %v1759 = vld [vmem:[#allocation8 + $0x1e8] sm:$0xf]
    %v1760 = vld [vmem:[#allocation8 + $0x1ec] sm:$0xf]
    %v1761 = vld [vmem:[#allocation8 + $0x1f0] sm:$0xf]
    %v1762 = vld [vmem:[#allocation8 + $0x1f4] sm:$0xf]
    %v1763 = vld [vmem:[#allocation8 + $0x1f8] sm:$0xf]
    %v1764 = vld [vmem:[#allocation8 + $0x1fc] sm:$0xf]
    %v1781 = vunpack.c.l.b16 %v1749
    %v1782 = vunpack.c.l.b16 %v1750
    %v1783 = vunpack.c.l.b16 %v1751
    %v1784 = vunpack.c.l.b16 %v1752
    %v1785 = vunpack.c.l.b16 %v1753
    %v1786 = vunpack.c.l.b16 %v1754
    %v1787 = vunpack.c.l.b16 %v1755
    %v1788 = vunpack.c.l.b16 %v1756
    %v1789 = vunpack.c.l.b16 %v1757
    %v1790 = vunpack.c.l.b16 %v1758
    %v1791 = vunpack.c.l.b16 %v1759
    %v1792 = vunpack.c.l.b16 %v1760
    %v1793 = vunpack.c.l.b16 %v1761
    %v1794 = vunpack.c.l.b16 %v1762
    %v1795 = vunpack.c.l.b16 %v1763
    %v1796 = vunpack.c.l.b16 %v1764
    %v1797 = vpack.c.b16 %v1782, %v1781
    %v1798 = vpack.c.b16 %v1784, %v1783
    %v1799 = vpack.c.b16 %v1786, %v1785
    %v1800 = vpack.c.b16 %v1788, %v1787
    %v1801 = vpack.c.b16 %v1790, %v1789
    %v1802 = vpack.c.b16 %v1792, %v1791
    %v1803 = vpack.c.b16 %v1794, %v1793
    %v1804 = vpack.c.b16 %v1796, %v1795
    %1813 = vmatpush.bf16.msra.mxu0 %v1804
    %1814 = vmatpush.bf16.msra.mxu0 %v1803
    %1815 = vmatpush.bf16.msra.mxu0 %v1802
    %1816 = vmatpush.bf16.msra.mxu0 %v1801
    %1817 = vmatpush.bf16.msra.mxu0 %v1800
    %1818 = vmatpush.bf16.msra.mxu0 %v1799
    %1819 = vmatpush.bf16.msra.mxu0 %v1798
    %1820 = vmatpush.bf16.msra.mxu0 %v1797
    %1821 = vmatmul.bf16.gmra.mxu0 %v1748
    %v1822 = vpop.f32.mrf.mxu0
    %v1823 = vadd.f32 0.0, %v1822
    %v1824 = vpop.f32.mrf.mxu0
    %1825 = vdwg.mxu0
    %v1826 = vadd.f32 %v1608, %v1823
    %v1827 = vld [vmem:[#allocation5 + $0x40] sm:$0xff]
    %v1828 = vld [vmem:[#allocation5 + $0x90] sm:$0xff]
    %v1829 = vld [vmem:[#allocation5 + $0xe0] sm:$0xff]
    %v1830 = vld [vmem:[#allocation5 + $0x130] sm:$0xff]
    %v1831 = vld [vmem:[#allocation5 + $0x180] sm:$0xff]
    %v1832 = vld [vmem:[#allocation5 + $0x1d0] sm:$0xff]
    %v1833 = vld [vmem:[#allocation5 + $0x220] sm:$0xff]
    %v1834 = vld [vmem:[#allocation5 + $0x270] sm:$0xff]
    %v1835 = vld [vmem:[#allocation5 + $0x2c0] sm:$0xff]
    %v1836 = vld [vmem:[#allocation5 + $0x310] sm:$0xff]
    %v1837 = vld [vmem:[#allocation5 + $0x360] sm:$0xff]
    %v1838 = vld [vmem:[#allocation5 + $0x3b0] sm:$0xff]
    %v1839 = vld [vmem:[#allocation5 + $0x400] sm:$0xff]
    %v1840 = vld [vmem:[#allocation5 + $0x450] sm:$0xff]
    %v1841 = vld [vmem:[#allocation5 + $0x4a0] sm:$0xff]
    %v1842 = vld [vmem:[#allocation5 + $0x4f0] sm:$0xff]
    %v1859 = vunpack.c.l.b16 %v1827
    %v1860 = vunpack.c.h.b16 %v1827
    %v1861 = vunpack.c.l.b16 %v1828
    %v1862 = vunpack.c.h.b16 %v1828
    %v1863 = vunpack.c.l.b16 %v1829
    %v1864 = vunpack.c.h.b16 %v1829
    %v1865 = vunpack.c.l.b16 %v1830
    %v1866 = vunpack.c.h.b16 %v1830
    %v1867 = vunpack.c.l.b16 %v1831
    %v1868 = vunpack.c.h.b16 %v1831
    %v1869 = vunpack.c.l.b16 %v1832
    %v1870 = vunpack.c.h.b16 %v1832
    %v1871 = vunpack.c.l.b16 %v1833
    %v1872 = vunpack.c.h.b16 %v1833
    %v1873 = vunpack.c.l.b16 %v1834
    %v1874 = vunpack.c.h.b16 %v1834
    %v1875 = vunpack.c.l.b16 %v1835
    %v1876 = vunpack.c.h.b16 %v1835
    %v1877 = vunpack.c.l.b16 %v1836
    %v1878 = vunpack.c.h.b16 %v1836
    %v1879 = vunpack.c.l.b16 %v1837
    %v1880 = vunpack.c.h.b16 %v1837
    %v1881 = vunpack.c.l.b16 %v1838
    %v1882 = vunpack.c.h.b16 %v1838
    %v1883 = vunpack.c.l.b16 %v1839
    %v1884 = vunpack.c.h.b16 %v1839
    %v1885 = vunpack.c.l.b16 %v1840
    %v1886 = vunpack.c.h.b16 %v1840
    %v1887 = vunpack.c.l.b16 %v1841
    %v1888 = vunpack.c.h.b16 %v1841
    %v1889 = vunpack.c.l.b16 %v1842
    %v1890 = vunpack.c.h.b16 %v1842
    %v1891 = vpack.c.b16 %v1861, %v1859
    %v1892 = vpack.c.b16 %v1862, %v1860
    %v1893 = vpack.c.b16 %v1865, %v1863
    %v1894 = vpack.c.b16 %v1866, %v1864
    %v1895 = vpack.c.b16 %v1869, %v1867
    %v1896 = vpack.c.b16 %v1870, %v1868
    %v1897 = vpack.c.b16 %v1873, %v1871
    %v1898 = vpack.c.b16 %v1874, %v1872
    %v1899 = vpack.c.b16 %v1877, %v1875
    %v1900 = vpack.c.b16 %v1878, %v1876
    %v1901 = vpack.c.b16 %v1881, %v1879
    %v1902 = vpack.c.b16 %v1882, %v1880
    %v1903 = vpack.c.b16 %v1885, %v1883
    %v1904 = vpack.c.b16 %v1886, %v1884
    %v1905 = vpack.c.b16 %v1889, %v1887
    %v1906 = vpack.c.b16 %v1890, %v1888
    %1923 = vmatpush.bf16.msra.mxu0 %v1905
    %1924 = vmatpush.bf16.msra.mxu0 %v1903
    %1925 = vmatpush.bf16.msra.mxu0 %v1901
    %1926 = vmatpush.bf16.msra.mxu0 %v1899
    %1927 = vmatpush.bf16.msra.mxu0 %v1897
    %1928 = vmatpush.bf16.msra.mxu0 %v1895
    %1929 = vmatpush.bf16.msra.mxu0 %v1893
    %1930 = vmatpush.bf16.msra.mxu0 %v1891
    %1931 = vmatmul.bf16.gmra.mxu0 %v84
    %v1932 = vpop.f32.mrf.mxu0
    %v1933 = vadd.f32 0.0, %v1932
    %v1934 = vpop.f32.mrf.mxu0
    %1935 = vdwg.mxu0
    %1936 = vmatpush.bf16.msra.mxu0 %v1906
    %1937 = vmatpush.bf16.msra.mxu0 %v1904
    %1938 = vmatpush.bf16.msra.mxu0 %v1902
    %1939 = vmatpush.bf16.msra.mxu0 %v1900
    %1940 = vmatpush.bf16.msra.mxu0 %v1898
    %1941 = vmatpush.bf16.msra.mxu0 %v1896
    %1942 = vmatpush.bf16.msra.mxu0 %v1894
    %1943 = vmatpush.bf16.msra.mxu0 %v1892
    %1944 = vmatmul.bf16.gmra.mxu0 %v84
    %v1945 = vpop.f32.mrf.mxu0
    %v1946 = vadd.f32 0.0, %v1945
    %v1947 = vpop.f32.mrf.mxu0
    %1948 = vdwg.mxu0
    %v1949 = vld [vmem:[#allocation7 + $0x8] sm:$0x1]
    %v1951 = vperm.slane %v1949, 0
    %v1953 = vadd.f32 %v1933, %v1951
    %1954 = vmax.xlane.f32.xlu0 %v1953
    %v1955 = vpop.xlane.xlu0 %1954
    %v1956 = vsub.f32 %v1953, %v1955
    %v1957 = vmul.f32 %v1956, 1.442695
    %v1958 = vpow.pop %v1957
    %1959 = vadd.xlane.f32.xlu0 %v1958
    %v1960 = vpop.xlane.xlu0 %1959
    %v1961 = vrcp.pop %v1960
    %v1962 = vmul.f32 %v1958, %v1961
    %v1963 = vpack.c.bf16 %v1962, %v1962
    %1964 = vst [vmem:[#allocation11 + $0x20] sm:$0xf] %v1963
    %v1965 = vmul.f32 %v1962, %v1946
    %v1966 = vpack.c.bf16 %v1965, %v1965
    %v1967 = vld [vmem:[#allocation8 + $0x200] sm:$0xf]
    %v1968 = vld [vmem:[#allocation8 + $0x204] sm:$0xf]
    %v1969 = vld [vmem:[#allocation8 + $0x208] sm:$0xf]
    %v1970 = vld [vmem:[#allocation8 + $0x20c] sm:$0xf]
    %v1971 = vld [vmem:[#allocation8 + $0x210] sm:$0xf]
    %v1972 = vld [vmem:[#allocation8 + $0x214] sm:$0xf]
    %v1973 = vld [vmem:[#allocation8 + $0x218] sm:$0xf]
    %v1974 = vld [vmem:[#allocation8 + $0x21c] sm:$0xf]
    %v1975 = vld [vmem:[#allocation8 + $0x220] sm:$0xf]
    %v1976 = vld [vmem:[#allocation8 + $0x224] sm:$0xf]
    %v1977 = vld [vmem:[#allocation8 + $0x228] sm:$0xf]
    %v1978 = vld [vmem:[#allocation8 + $0x22c] sm:$0xf]
    %v1979 = vld [vmem:[#allocation8 + $0x230] sm:$0xf]
    %v1980 = vld [vmem:[#allocation8 + $0x234] sm:$0xf]
    %v1981 = vld [vmem:[#allocation8 + $0x238] sm:$0xf]
    %v1982 = vld [vmem:[#allocation8 + $0x23c] sm:$0xf]
    %v1999 = vunpack.c.l.b16 %v1967
    %v2000 = vunpack.c.l.b16 %v1968
    %v2001 = vunpack.c.l.b16 %v1969
    %v2002 = vunpack.c.l.b16 %v1970
    %v2003 = vunpack.c.l.b16 %v1971
    %v2004 = vunpack.c.l.b16 %v1972
    %v2005 = vunpack.c.l.b16 %v1973
    %v2006 = vunpack.c.l.b16 %v1974
    %v2007 = vunpack.c.l.b16 %v1975
    %v2008 = vunpack.c.l.b16 %v1976
    %v2009 = vunpack.c.l.b16 %v1977
    %v2010 = vunpack.c.l.b16 %v1978
    %v2011 = vunpack.c.l.b16 %v1979
    %v2012 = vunpack.c.l.b16 %v1980
    %v2013 = vunpack.c.l.b16 %v1981
    %v2014 = vunpack.c.l.b16 %v1982
    %v2015 = vpack.c.b16 %v2000, %v1999
    %v2016 = vpack.c.b16 %v2002, %v2001
    %v2017 = vpack.c.b16 %v2004, %v2003
    %v2018 = vpack.c.b16 %v2006, %v2005
    %v2019 = vpack.c.b16 %v2008, %v2007
    %v2020 = vpack.c.b16 %v2010, %v2009
    %v2021 = vpack.c.b16 %v2012, %v2011
    %v2022 = vpack.c.b16 %v2014, %v2013
    %2031 = vmatpush.bf16.msra.mxu0 %v2022
    %2032 = vmatpush.bf16.msra.mxu0 %v2021
    %2033 = vmatpush.bf16.msra.mxu0 %v2020
    %2034 = vmatpush.bf16.msra.mxu0 %v2019
    %2035 = vmatpush.bf16.msra.mxu0 %v2018
    %2036 = vmatpush.bf16.msra.mxu0 %v2017
    %2037 = vmatpush.bf16.msra.mxu0 %v2016
    %2038 = vmatpush.bf16.msra.mxu0 %v2015
    %2039 = vmatmul.bf16.gmra.mxu0 %v1966
    %v2040 = vpop.f32.mrf.mxu0
    %v2041 = vadd.f32 0.0, %v2040
    %v2042 = vpop.f32.mrf.mxu0
    %2043 = vdwg.mxu0
    %v2044 = vadd.f32 %v1826, %v2041
    %v2045 = vld [vmem:[#allocation5 + $0x48] sm:$0xff]
    %v2046 = vld [vmem:[#allocation5 + $0x98] sm:$0xff]
    %v2047 = vld [vmem:[#allocation5 + $0xe8] sm:$0xff]
    %v2048 = vld [vmem:[#allocation5 + $0x138] sm:$0xff]
    %v2049 = vld [vmem:[#allocation5 + $0x188] sm:$0xff]
    %v2050 = vld [vmem:[#allocation5 + $0x1d8] sm:$0xff]
    %v2051 = vld [vmem:[#allocation5 + $0x228] sm:$0xff]
    %v2052 = vld [vmem:[#allocation5 + $0x278] sm:$0xff]
    %v2053 = vld [vmem:[#allocation5 + $0x2c8] sm:$0xff]
    %v2054 = vld [vmem:[#allocation5 + $0x318] sm:$0xff]
    %v2055 = vld [vmem:[#allocation5 + $0x368] sm:$0xff]
    %v2056 = vld [vmem:[#allocation5 + $0x3b8] sm:$0xff]
    %v2057 = vld [vmem:[#allocation5 + $0x408] sm:$0xff]
    %v2058 = vld [vmem:[#allocation5 + $0x458] sm:$0xff]
    %v2059 = vld [vmem:[#allocation5 + $0x4a8] sm:$0xff]
    %v2060 = vld [vmem:[#allocation5 + $0x4f8] sm:$0xff]
    %v2077 = vunpack.c.l.b16 %v2045
    %v2078 = vunpack.c.h.b16 %v2045
    %v2079 = vunpack.c.l.b16 %v2046
    %v2080 = vunpack.c.h.b16 %v2046
    %v2081 = vunpack.c.l.b16 %v2047
    %v2082 = vunpack.c.h.b16 %v2047
    %v2083 = vunpack.c.l.b16 %v2048
    %v2084 = vunpack.c.h.b16 %v2048
    %v2085 = vunpack.c.l.b16 %v2049
    %v2086 = vunpack.c.h.b16 %v2049
    %v2087 = vunpack.c.l.b16 %v2050
    %v2088 = vunpack.c.h.b16 %v2050
    %v2089 = vunpack.c.l.b16 %v2051
    %v2090 = vunpack.c.h.b16 %v2051
    %v2091 = vunpack.c.l.b16 %v2052
    %v2092 = vunpack.c.h.b16 %v2052
    %v2093 = vunpack.c.l.b16 %v2053
    %v2094 = vunpack.c.h.b16 %v2053
    %v2095 = vunpack.c.l.b16 %v2054
    %v2096 = vunpack.c.h.b16 %v2054
    %v2097 = vunpack.c.l.b16 %v2055
    %v2098 = vunpack.c.h.b16 %v2055
    %v2099 = vunpack.c.l.b16 %v2056
    %v2100 = vunpack.c.h.b16 %v2056
    %v2101 = vunpack.c.l.b16 %v2057
    %v2102 = vunpack.c.h.b16 %v2057
    %v2103 = vunpack.c.l.b16 %v2058
    %v2104 = vunpack.c.h.b16 %v2058
    %v2105 = vunpack.c.l.b16 %v2059
    %v2106 = vunpack.c.h.b16 %v2059
    %v2107 = vunpack.c.l.b16 %v2060
    %v2108 = vunpack.c.h.b16 %v2060
    %v2109 = vpack.c.b16 %v2079, %v2077
    %v2110 = vpack.c.b16 %v2080, %v2078
    %v2111 = vpack.c.b16 %v2083, %v2081
    %v2112 = vpack.c.b16 %v2084, %v2082
    %v2113 = vpack.c.b16 %v2087, %v2085
    %v2114 = vpack.c.b16 %v2088, %v2086
    %v2115 = vpack.c.b16 %v2091, %v2089
    %v2116 = vpack.c.b16 %v2092, %v2090
    %v2117 = vpack.c.b16 %v2095, %v2093
    %v2118 = vpack.c.b16 %v2096, %v2094
    %v2119 = vpack.c.b16 %v2099, %v2097
    %v2120 = vpack.c.b16 %v2100, %v2098
    %v2121 = vpack.c.b16 %v2103, %v2101
    %v2122 = vpack.c.b16 %v2104, %v2102
    %v2123 = vpack.c.b16 %v2107, %v2105
    %v2124 = vpack.c.b16 %v2108, %v2106
    %2141 = vmatpush.bf16.msra.mxu0 %v2123
    %2142 = vmatpush.bf16.msra.mxu0 %v2121
    %2143 = vmatpush.bf16.msra.mxu0 %v2119
    %2144 = vmatpush.bf16.msra.mxu0 %v2117
    %2145 = vmatpush.bf16.msra.mxu0 %v2115
    %2146 = vmatpush.bf16.msra.mxu0 %v2113
    %2147 = vmatpush.bf16.msra.mxu0 %v2111
    %2148 = vmatpush.bf16.msra.mxu0 %v2109
    %2149 = vmatmul.bf16.gmra.mxu0 %v84
    %v2150 = vpop.f32.mrf.mxu0
    %v2151 = vadd.f32 0.0, %v2150
    %v2152 = vpop.f32.mrf.mxu0
    %2153 = vdwg.mxu0
    %2154 = vmatpush.bf16.msra.mxu0 %v2124
    %2155 = vmatpush.bf16.msra.mxu0 %v2122
    %2156 = vmatpush.bf16.msra.mxu0 %v2120
    %2157 = vmatpush.bf16.msra.mxu0 %v2118
    %2158 = vmatpush.bf16.msra.mxu0 %v2116
    %2159 = vmatpush.bf16.msra.mxu0 %v2114
    %2160 = vmatpush.bf16.msra.mxu0 %v2112
    %2161 = vmatpush.bf16.msra.mxu0 %v2110
    %2162 = vmatmul.bf16.gmra.mxu0 %v84
    %v2163 = vpop.f32.mrf.mxu0
    %v2164 = vadd.f32 0.0, %v2163
    %v2165 = vpop.f32.mrf.mxu0
    %2166 = vdwg.mxu0
    %v2167 = vld [vmem:[#allocation7 + $0x9] sm:$0x1]
    %v2169 = vperm.slane %v2167, 0
    %v2171 = vadd.f32 %v2151, %v2169
    %2172 = vmax.xlane.f32.xlu0 %v2171
    %v2173 = vpop.xlane.xlu0 %2172
    %v2174 = vsub.f32 %v2171, %v2173
    %v2175 = vmul.f32 %v2174, 1.442695
    %v2176 = vpow.pop %v2175
    %2177 = vadd.xlane.f32.xlu0 %v2176
    %v2178 = vpop.xlane.xlu0 %2177
    %v2179 = vrcp.pop %v2178
    %v2180 = vmul.f32 %v2176, %v2179
    %v2181 = vpack.c.bf16 %v2180, %v2180
    %2182 = vst [vmem:[#allocation11 + $0x24] sm:$0xf] %v2181
    %v2183 = vmul.f32 %v2180, %v2164
    %v2184 = vpack.c.bf16 %v2183, %v2183
    %v2185 = vld [vmem:[#allocation8 + $0x240] sm:$0xf]
    %v2186 = vld [vmem:[#allocation8 + $0x244] sm:$0xf]
    %v2187 = vld [vmem:[#allocation8 + $0x248] sm:$0xf]
    %v2188 = vld [vmem:[#allocation8 + $0x24c] sm:$0xf]
    %v2189 = vld [vmem:[#allocation8 + $0x250] sm:$0xf]
    %v2190 = vld [vmem:[#allocation8 + $0x254] sm:$0xf]
    %v2191 = vld [vmem:[#allocation8 + $0x258] sm:$0xf]
    %v2192 = vld [vmem:[#allocation8 + $0x25c] sm:$0xf]
    %v2193 = vld [vmem:[#allocation8 + $0x260] sm:$0xf]
    %v2194 = vld [vmem:[#allocation8 + $0x264] sm:$0xf]
    %v2195 = vld [vmem:[#allocation8 + $0x268] sm:$0xf]
    %v2196 = vld [vmem:[#allocation8 + $0x26c] sm:$0xf]
    %v2197 = vld [vmem:[#allocation8 + $0x270] sm:$0xf]
    %v2198 = vld [vmem:[#allocation8 + $0x274] sm:$0xf]
    %v2199 = vld [vmem:[#allocation8 + $0x278] sm:$0xf]
    %v2200 = vld [vmem:[#allocation8 + $0x27c] sm:$0xf]
    %v2217 = vunpack.c.l.b16 %v2185
    %v2218 = vunpack.c.l.b16 %v2186
    %v2219 = vunpack.c.l.b16 %v2187
    %v2220 = vunpack.c.l.b16 %v2188
    %v2221 = vunpack.c.l.b16 %v2189
    %v2222 = vunpack.c.l.b16 %v2190
    %v2223 = vunpack.c.l.b16 %v2191
    %v2224 = vunpack.c.l.b16 %v2192
    %v2225 = vunpack.c.l.b16 %v2193
    %v2226 = vunpack.c.l.b16 %v2194
    %v2227 = vunpack.c.l.b16 %v2195
    %v2228 = vunpack.c.l.b16 %v2196
    %v2229 = vunpack.c.l.b16 %v2197
    %v2230 = vunpack.c.l.b16 %v2198
    %v2231 = vunpack.c.l.b16 %v2199
    %v2232 = vunpack.c.l.b16 %v2200
    %v2233 = vpack.c.b16 %v2218, %v2217
    %v2234 = vpack.c.b16 %v2220, %v2219
    %v2235 = vpack.c.b16 %v2222, %v2221
    %v2236 = vpack.c.b16 %v2224, %v2223
    %v2237 = vpack.c.b16 %v2226, %v2225
    %v2238 = vpack.c.b16 %v2228, %v2227
    %v2239 = vpack.c.b16 %v2230, %v2229
    %v2240 = vpack.c.b16 %v2232, %v2231
    %2249 = vmatpush.bf16.msra.mxu0 %v2240
    %2250 = vmatpush.bf16.msra.mxu0 %v2239
    %2251 = vmatpush.bf16.msra.mxu0 %v2238
    %2252 = vmatpush.bf16.msra.mxu0 %v2237
    %2253 = vmatpush.bf16.msra.mxu0 %v2236
    %2254 = vmatpush.bf16.msra.mxu0 %v2235
    %2255 = vmatpush.bf16.msra.mxu0 %v2234
    %2256 = vmatpush.bf16.msra.mxu0 %v2233
    %2257 = vmatmul.bf16.gmra.mxu0 %v2184
    %v2258 = vpop.f32.mrf.mxu0
    %v2259 = vadd.f32 0.0, %v2258
    %v2260 = vpop.f32.mrf.mxu0
    %2261 = vdwg.mxu0
    %v2262 = vadd.f32 %v2044, %v2259
    %v2263 = vld [vmem:[%s4] sm:$0x1]
    %v2265 = vperm.slane %v2263, 0
    %v2267 = vadd.f32 %v2262, %v2265
    %2268 = vst [vmem:[#allocation10] sm:$0xff] %v2267
    // Predicated region
    $region38: #{tpu_custom_call.1} parent=1 // pred_check
      _
    $region39: #{tpu_custom_call.1} parent=1 // pred_check_branch
      %2270 = sbr.rel (0) target = $region41
    $region40: #{tpu_custom_call.1} parent=1 // pred_region
      %2272 = vsyncadd [#allocation4], 0
      %s2274 = sshll.u32 [#allocation10], 4
      %s2275 = int_to_ptr.vmem [resolvable:$true] %s2274
      %s2276 = sshll.u32 %s5, 4
      %s2277 = int_to_ptr.hbm [resolvable:$true] %s2276
      %2279 = dma.vmem_to_hbm [thread:$0]  %s2275, 128, %s2277, [#allocation4]
    $region41: #{tpu_custom_call.1} parent=1 // pred_fallthru
      _
    // Predicated region
    $region42: #{tpu_custom_call.1} parent=1 // pred_check
      _
    $region43: #{tpu_custom_call.1} parent=1 // pred_check_branch
      %2281 = sbr.rel (0) target = $region45
    $region44: #{tpu_custom_call.1} parent=1 // pred_region
      %2283 = vsyncadd [#allocation12], 0
      %s2285 = sshll.u32 [#allocation11], 4
      %s2286 = int_to_ptr.vmem [resolvable:$true] %s2285
      %s2287 = sshll.u32 %s6, 4
      %s2288 = int_to_ptr.hbm [resolvable:$true] %s2287
      %2290 = dma.vmem_to_hbm [thread:$0]  %s2286, 640, %s2288, [#allocation12]
    $region45: #{tpu_custom_call.1} parent=1 // pred_fallthru
      _
    // Predicated region
    $region46: #{tpu_custom_call.1} parent=1 // pred_check
      _
    $region47: #{tpu_custom_call.1} parent=1 // pred_check_branch
      %2292 = sbr.rel (0) target = $region49
    $region48: #{tpu_custom_call.1} parent=1 // pred_region
      %2294 = dma.done [#allocation4], 128
    $region49: #{tpu_custom_call.1} parent=1 // pred_fallthru
      _
    // Predicated region
    $region50: #{tpu_custom_call.1} parent=1 // pred_check
      _
    $region51: #{tpu_custom_call.1} parent=1 // pred_check_branch
      %2296 = sbr.rel (0) target = $region53
    $region52: #{tpu_custom_call.1} parent=1 // pred_region
      %2298 = dma.done [#allocation12], 640
    $region53: #{tpu_custom_call.1} parent=1 // pred_fallthru
      _
    %2299 = vsyncpa [#allocation3], 1
    %2300 = vsyncpa [#allocation6], 1
    %2301 = vsyncpa [#allocation9], 1
    %2302 = vsyncpa [#allocation4], 1
    %2303 = vsyncpa [#allocation12], 1

</llo_original>
